<compile_context>
chip_gen: v7x
topology: tpu7x:2x2x1
jax: 0.10.0
libtpu: 0.0.40
codegen_flags: <defaults>
</compile_context>

<pallas_src>
import functools

import jax
import jax.numpy as jnp
from jax.experimental import pallas as pl
from jax.experimental.pallas import tpu as pltpu


def _round_up(n, m):
    return ((n + m - 1) // m) * m


def _pick_tile_b(batch, requested):
    """Largest 8-aligned tile <= requested, but keep >=2 grid steps (v7x 2 TCs)."""
    t = min(requested, _round_up(batch, 8))
    if batch > 8 and _round_up(batch, t) // t < 2:
        t = _round_up((batch + 1) // 2, 8)
    return t


def _vae_kernel(
    xin_ref,                       # (tile_b, in_w) bf16, lanes = [x | noise | 0-pad]
    w_in_ref, w_q1b_ref, w_head_ref, w_p1_ref, w_p2_ref, w_p3_ref,
    b_ref,                         # (1, total_bias) f32, all 7 biases packed
    out_ref,                       # (tile_b, out_w_pad) f32, [re_x | mu | logv | 0-pad]
    *, x_dim, h1_dim, h2_dim, z_dim,
):
    mm_dtype = w_in_ref.dtype
    f32 = jnp.float32

    # ---- unpack biases (static lane slices of the single packed bias row) ----
    o = 0
    b_q1a = b_ref[:, o:o + h1_dim]; o += h1_dim
    b_q1b = b_ref[:, o:o + h2_dim]; o += h2_dim
    b_head = b_ref[:, o:o + 2 * z_dim]; o += 2 * z_dim
    b_p1 = b_ref[:, o:o + h2_dim]; o += h2_dim
    b_p2 = b_ref[:, o:o + h1_dim]; o += h1_dim
    b_p3 = b_ref[:, o:o + x_dim]

    xin = xin_ref[...]                                   # bf16, full 128-multiple tile
    noise = xin[:, x_dim:x_dim + z_dim].astype(f32)      # reparam noise back to f32

    # ---- encoder: Linear -> ReLU -> Linear -> ReLU ----
    # w_in is the first-layer weight zero-padded to the packed input width, so
    # the noise / pad lanes hit zero rows and contribute nothing.
    h1 = jnp.dot(xin, w_in_ref[...], preferred_element_type=f32) + b_q1a
    h1 = jnp.maximum(h1, 0.0).astype(mm_dtype)
    h2 = jnp.dot(h1, w_q1b_ref[...], preferred_element_type=f32) + b_q1b
    h2 = jnp.maximum(h2, 0.0).astype(mm_dtype)

    # ---- fused mu|logv head: one (h2_dim, 2*z_dim) matmul ----
    head = jnp.dot(h2, w_head_ref[...], preferred_element_type=f32) + b_head
    mu = head[:, :z_dim]
    logv = head[:, z_dim:]

    # ---- reparameterization: z = mu + noise * exp(0.5 * logv)  (f32) ----
    std = jnp.exp(0.5 * logv)
    z = (mu + noise * std).astype(mm_dtype)

    # ---- decoder: Linear -> ReLU -> Linear -> ReLU -> Linear -> Sigmoid ----
    d1 = jnp.dot(z, w_p1_ref[...], preferred_element_type=f32) + b_p1
    d1 = jnp.maximum(d1, 0.0).astype(mm_dtype)
    d2 = jnp.dot(d1, w_p2_ref[...], preferred_element_type=f32) + b_p2
    d2 = jnp.maximum(d2, 0.0).astype(mm_dtype)
    logits = jnp.dot(d2, w_p3_ref[...], preferred_element_type=f32) + b_p3
    re_x = jax.nn.sigmoid(logits)

    # ---- single lane-dense store: [re_x | head | zero pad] ----
    packed = jnp.concatenate([re_x, head], axis=-1)
    pad = out_ref.shape[-1] - packed.shape[-1]
    if pad:
        packed = jnp.concatenate(
            [packed, jnp.zeros((packed.shape[0], pad), packed.dtype)], axis=-1)
    out_ref[...] = packed


def pack_params(params, mm_dtype=jnp.bfloat16):
    """One-time packing: bf16 casts, fused mu|logv head, zero-padded first-layer
    weight (to the 128-multiple packed [x|noise] width), single packed bias row."""
    x_dim, h1_dim = params["w_q1a"].shape
    z_dim = params["w_mu"].shape[1]
    in_w = _round_up(x_dim + z_dim, 128)

    w_in = jnp.zeros((in_w, h1_dim), mm_dtype)
    w_in = w_in.at[:x_dim].set(params["w_q1a"].astype(mm_dtype))

    return {
        "w_in": w_in,
        "w_q1b": params["w_q1b"].astype(mm_dtype),
        "w_head": jnp.concatenate([params["w_mu"], params["w_lv"]],
                                  axis=1).astype(mm_dtype),
        "w_p1": params["w_p1"].astype(mm_dtype),
        "w_p2": params["w_p2"].astype(mm_dtype),
        "w_p3": params["w_p3"].astype(mm_dtype),
        "b_packed": jnp.concatenate(
            [params["b_q1a"], params["b_q1b"], params["b_mu"], params["b_lv"],
             params["b_p1"], params["b_p2"], params["b_p3"]],
            axis=1).astype(jnp.float32),
    }


@functools.partial(jax.jit, static_argnames=("tile_b",))
def vae_forward(x, noise, packed, *, tile_b=1024):
    """Full VAE forward in one batch-tiled Pallas kernel.

    Returns (re_x, (mu, logv)), mirroring VAE_network.forward.
    `packed` must come from pack_params() (packing is hoisted out of this call).
    """
    B, x_dim = x.shape
    z_dim = noise.shape[1]
    h1_dim, h2_dim = packed["w_q1b"].shape
    in_w = packed["w_in"].shape[0]
    mm_dtype = packed["w_in"].dtype
    total_bias = packed["b_packed"].shape[1]
    out_w = x_dim + 2 * z_dim
    out_w_pad = _round_up(out_w, 128)          # lane-dense output tile

    tile_b = _pick_tile_b(B, tile_b)
    pad_b = _round_up(B, tile_b)
    grid = (pad_b // tile_b,)

    # Pack [x | noise] into one lane-dense bf16 tile (single full-lane DMA stream).
    xin = jnp.concatenate([x.astype(mm_dtype), noise.astype(mm_dtype)], axis=1)
    xin = jnp.pad(xin, ((0, pad_b - B), (0, in_w - xin.shape[1])))

    tiled = lambda shape: pl.BlockSpec(shape, lambda i: (i, 0))      # per-batch-tile
    resident = lambda shape: pl.BlockSpec(shape, lambda i: (0, 0))   # stays in VMEM

    kernel = functools.partial(
        _vae_kernel, x_dim=x_dim, h1_dim=h1_dim, h2_dim=h2_dim, z_dim=z_dim)

    # Explicit VMEM budget (v5e's scoped default is only 16 MiB).
    weight_bytes = sum(int(packed[k].size) * packed[k].dtype.itemsize
                       for k in ("w_in", "w_q1b", "w_head",
                                 "w_p1", "w_p2", "w_p3", "b_packed"))
    tile_bytes = tile_b * (in_w * 2 + out_w_pad * 4)       # bf16 in, f32 out per row
    act_bytes = 8 * tile_b * max(h1_dim, h2_dim, 2 * z_dim, x_dim, out_w_pad) * 4
    vmem_limit = 2 * tile_bytes + 2 * weight_bytes + act_bytes + (4 << 20)
    vmem_limit = int(min(max(vmem_limit, 16 << 20), 48 << 20))  # safe on v7x's 64 MiB

    out = pl.pallas_call(
        kernel,
        out_shape=jax.ShapeDtypeStruct((pad_b, out_w_pad), jnp.float32),
        grid=grid,
        in_specs=[
            tiled((tile_b, in_w)),             # packed [x | noise | pad]
            resident((in_w, h1_dim)),          # w_in (zero-padded q1a)
            resident((h1_dim, h2_dim)),        # w_q1b
            resident((h2_dim, 2 * z_dim)),     # w_head (mu|logv fused)
            resident((z_dim, h2_dim)),         # w_p1
            resident((h2_dim, h1_dim)),        # w_p2
            resident((h1_dim, x_dim)),         # w_p3
            resident((1, total_bias)),         # packed biases
        ],
        out_specs=tiled((tile_b, out_w_pad)),
        compiler_params=pltpu.CompilerParams(
            dimension_semantics=("parallel",),  # batch tiles shard across v7x's 2 TCs
            vmem_limit_bytes=vmem_limit,
        ),
    )(xin, packed["w_in"], packed["w_q1b"], packed["w_head"],
      packed["w_p1"], packed["w_p2"], packed["w_p3"], packed["b_packed"])

    out = out[:B]
    re_x = out[:, :x_dim]
    mu = out[:, x_dim:x_dim + z_dim]
    logv = out[:, x_dim + z_dim:x_dim + 2 * z_dim]
    return re_x, (mu, logv)


def init_params(key, x_dim, h1_dim, h2_dim, z_dim):
    """PyTorch-like init: U(-1/sqrt(fan_in), 1/sqrt(fan_in)); weights stored (in, out)."""
    def linear(key, fan_in, fan_out):
        kw, kb = jax.random.split(key)
        bound = 1.0 / jnp.sqrt(float(fan_in))
        w = jax.random.uniform(kw, (fan_in, fan_out), jnp.float32, -bound, bound)
        b = jax.random.uniform(kb, (1, fan_out), jnp.float32, -bound, bound)
        return w, b

    keys = jax.random.split(key, 7)
    params = {}
    params["w_q1a"], params["b_q1a"] = linear(keys[0], x_dim, h1_dim)
    params["w_q1b"], params["b_q1b"] = linear(keys[1], h1_dim, h2_dim)
    params["w_mu"], params["b_mu"] = linear(keys[2], h2_dim, z_dim)
    params["w_lv"], params["b_lv"] = linear(keys[3], h2_dim, z_dim)
    params["w_p1"], params["b_p1"] = linear(keys[4], z_dim, h2_dim)
    params["w_p2"], params["b_p2"] = linear(keys[5], h2_dim, h1_dim)
    params["w_p3"], params["b_p3"] = linear(keys[6], h1_dim, x_dim)
    return params


def vae_forward_ref(x, noise, params, mm_dtype=jnp.bfloat16):
    """Pure-JAX reference on the same bf16-matmul / f32-accumulate contract.

    Note: noise passes through bf16 (it rides in the kernel's packed bf16 input
    tile); z is cast to bf16 before the decoder anyway, so this stays well
    within the bf16 precision contract vs. the f32 PyTorch model (~2e-3).
    """
    f32 = jnp.float32

    def mm(a, wk):
        return jnp.dot(a.astype(mm_dtype), params[wk].astype(mm_dtype),
                       preferred_element_type=f32)

    h1 = jnp.maximum(mm(x, "w_q1a") + params["b_q1a"], 0.0)
    h2 = jnp.maximum(mm(h1, "w_q1b") + params["b_q1b"], 0.0)
    mu = mm(h2, "w_mu") + params["b_mu"]
    logv = mm(h2, "w_lv") + params["b_lv"]
    noise_bf = noise.astype(mm_dtype).astype(f32)
    z = mu + noise_bf * jnp.exp(0.5 * logv)
    d1 = jnp.maximum(mm(z, "w_p1") + params["b_p1"], 0.0)
    d2 = jnp.maximum(mm(d1, "w_p2") + params["b_p2"], 0.0)
    re_x = jax.nn.sigmoid(mm(d2, "w_p3") + params["b_p3"])
    return re_x, (mu, logv)


if __name__ == "__main__":
    # Small shapes consistent with the module's MLP structure; B large enough
    # to exercise a 2-step batch grid (128 rows/tile -> both v7x TCs get work).
    B, x_dim, h1_dim, h2_dim, z_dim = 256, 64, 32, 32, 16

    key = jax.random.PRNGKey(0)
    k_params, k_x, k_noise = jax.random.split(key, 3)

    params = init_params(k_params, x_dim, h1_dim, h2_dim, z_dim)
    packed = pack_params(params)      # hoisted: packing/casting runs once, not per call

    x = jax.random.uniform(k_x, (B, x_dim), jnp.float32)        # e.g. pixel data in [0,1]
    noise = jax.random.normal(k_noise, (B, z_dim), jnp.float32)  # torch.randn_like stand-in

    re_x, (mu, logv) = vae_forward(x, noise, packed)
    jax.block_until_ready((re_x, mu, logv))

    # Cross-check against the pure-JAX reference (same bf16/f32 numerics).
    re_x_r, (mu_r, logv_r) = vae_forward_ref(x, noise, params)
    assert re_x.shape == (B, x_dim) and mu.shape == (B, z_dim) and logv.shape == (B, z_dim)
    assert jnp.allclose(re_x, re_x_r, atol=2e-3, rtol=2e-3)
    assert jnp.allclose(mu, mu_r, atol=2e-3, rtol=2e-3)
    assert jnp.allclose(logv, logv_r, atol=2e-3, rtol=2e-3)

    print("KERNEL_OK")
</pallas_src>

<mosaic_0001>
module attributes {stable_mosaic.version = 11 : i64} {
  func.func @_vae_kernel(%arg0: i32, %arg1: memref<128x128xbf16, #tpu.memory_space<vmem>>, %arg2: memref<128x32xbf16, #tpu.memory_space<vmem>>, %arg3: memref<32x32xbf16, #tpu.memory_space<vmem>>, %arg4: memref<32x32xbf16, #tpu.memory_space<vmem>>, %arg5: memref<16x32xbf16, #tpu.memory_space<vmem>>, %arg6: memref<32x32xbf16, #tpu.memory_space<vmem>>, %arg7: memref<32x64xbf16, #tpu.memory_space<vmem>>, %arg8: memref<1x224xf32, #tpu.memory_space<vmem>>, %arg9: memref<128x128xf32, #tpu.memory_space<vmem>>) attributes {dimension_semantics = [#tpu.dimension_semantics<parallel>], iteration_bounds = array<i64: 2>, scalar_prefetch = 0 : i64, scratch_operands = 0 : i64, tpu.core_type = #tpu.core_type<tc>, window_params = [{transform_indices = @transform_0, window_bounds = array<i64: 128, 128>}, {pipeline_mode = #tpu.pipeline_mode<synchronous>, transform_indices = @transform_1, window_bounds = array<i64: 128, 32>}, {pipeline_mode = #tpu.pipeline_mode<synchronous>, transform_indices = @transform_2, window_bounds = array<i64: 32, 32>}, {pipeline_mode = #tpu.pipeline_mode<synchronous>, transform_indices = @transform_3, window_bounds = array<i64: 32, 32>}, {pipeline_mode = #tpu.pipeline_mode<synchronous>, transform_indices = @transform_4, window_bounds = array<i64: 16, 32>}, {pipeline_mode = #tpu.pipeline_mode<synchronous>, transform_indices = @transform_5, window_bounds = array<i64: 32, 32>}, {pipeline_mode = #tpu.pipeline_mode<synchronous>, transform_indices = @transform_6, window_bounds = array<i64: 32, 64>}, {pipeline_mode = #tpu.pipeline_mode<synchronous>, transform_indices = @transform_7, window_bounds = array<i64: 1, 224>}, {transform_indices = @transform_8, window_bounds = array<i64: 128, 128>}]} {
    %c0 = arith.constant 0 : index
    %c0_0 = arith.constant 0 : index
    %0 = vector.load %arg8[%c0, %c0_0] : memref<1x224xf32, #tpu.memory_space<vmem>>, vector<1x32xf32>
    %c0_1 = arith.constant 0 : index
    %c32 = arith.constant 32 : index
    %1 = vector.load %arg8[%c0_1, %c32] : memref<1x224xf32, #tpu.memory_space<vmem>>, vector<1x32xf32>
    %c0_2 = arith.constant 0 : index
    %c64 = arith.constant 64 : index
    %2 = vector.load %arg8[%c0_2, %c64] : memref<1x224xf32, #tpu.memory_space<vmem>>, vector<1x32xf32>
    %c0_3 = arith.constant 0 : index
    %c96 = arith.constant 96 : index
    %3 = vector.load %arg8[%c0_3, %c96] : memref<1x224xf32, #tpu.memory_space<vmem>>, vector<1x32xf32>
    %c0_4 = arith.constant 0 : index
    %c128 = arith.constant 128 : index
    %4 = vector.load %arg8[%c0_4, %c128] : memref<1x224xf32, #tpu.memory_space<vmem>>, vector<1x32xf32>
    %c0_5 = arith.constant 0 : index
    %c160 = arith.constant 160 : index
    %5 = vector.load %arg8[%c0_5, %c160] : memref<1x224xf32, #tpu.memory_space<vmem>>, vector<1x64xf32>
    %c0_6 = arith.constant 0 : index
    %c0_7 = arith.constant 0 : index
    %6 = vector.load %arg1[%c0_6, %c0_7] : memref<128x128xbf16, #tpu.memory_space<vmem>>, vector<128x128xbf16>
    %7 = vector.extract_strided_slice %6 {offsets = [0, 64], sizes = [128, 16], strides = [1, 1]} : vector<128x128xbf16> to vector<128x16xbf16>
    %8 = arith.extf %7 : vector<128x16xbf16> to vector<128x16xf32>
    %c0_8 = arith.constant 0 : index
    %c0_9 = arith.constant 0 : index
    %9 = vector.load %arg2[%c0_8, %c0_9] : memref<128x32xbf16, #tpu.memory_space<vmem>>, vector<128x32xbf16>
    %cst = arith.constant dense<0.000000e+00> : vector<128x32xf32>
    %10 = tpu.matmul %6, %9, %cst {dimension_numbers = #tpu.dot_dimension_numbers<[1], [0], [0], [1], [0, 0, 1, 1], [], []>} : vector<128x128xbf16>, vector<128x32xbf16>, vector<128x32xf32> -> vector<128x32xf32>
    %11 = vector.broadcast %0 : vector<1x32xf32> to vector<128x32xf32>
    %12 = arith.addf %10, %11 : vector<128x32xf32>
    %cst_10 = arith.constant 0.000000e+00 : f32
    %13 = vector.broadcast %cst_10 : f32 to vector<128x32xf32>
    %14 = arith.maximumf %12, %13 : vector<128x32xf32>
    %15 = arith.truncf %14 : vector<128x32xf32> to vector<128x32xbf16>
    %c0_11 = arith.constant 0 : index
    %c0_12 = arith.constant 0 : index
    %16 = vector.load %arg3[%c0_11, %c0_12] : memref<32x32xbf16, #tpu.memory_space<vmem>>, vector<32x32xbf16>
    %cst_13 = arith.constant dense<0.000000e+00> : vector<128x32xf32>
    %17 = tpu.matmul %15, %16, %cst_13 {dimension_numbers = #tpu.dot_dimension_numbers<[1], [0], [0], [1], [0, 0, 1, 1], [], []>} : vector<128x32xbf16>, vector<32x32xbf16>, vector<128x32xf32> -> vector<128x32xf32>
    %18 = vector.broadcast %1 : vector<1x32xf32> to vector<128x32xf32>
    %19 = arith.addf %17, %18 : vector<128x32xf32>
    %cst_14 = arith.constant 0.000000e+00 : f32
    %20 = vector.broadcast %cst_14 : f32 to vector<128x32xf32>
    %21 = arith.maximumf %19, %20 : vector<128x32xf32>
    %22 = arith.truncf %21 : vector<128x32xf32> to vector<128x32xbf16>
    %c0_15 = arith.constant 0 : index
    %c0_16 = arith.constant 0 : index
    %23 = vector.load %arg4[%c0_15, %c0_16] : memref<32x32xbf16, #tpu.memory_space<vmem>>, vector<32x32xbf16>
    %cst_17 = arith.constant dense<0.000000e+00> : vector<128x32xf32>
    %24 = tpu.matmul %22, %23, %cst_17 {dimension_numbers = #tpu.dot_dimension_numbers<[1], [0], [0], [1], [0, 0, 1, 1], [], []>} : vector<128x32xbf16>, vector<32x32xbf16>, vector<128x32xf32> -> vector<128x32xf32>
    %25 = vector.broadcast %2 : vector<1x32xf32> to vector<128x32xf32>
    %26 = arith.addf %24, %25 : vector<128x32xf32>
    %27 = vector.extract_strided_slice %26 {offsets = [0, 0], sizes = [128, 16], strides = [1, 1]} : vector<128x32xf32> to vector<128x16xf32>
    %28 = vector.extract_strided_slice %26 {offsets = [0, 16], sizes = [128, 16], strides = [1, 1]} : vector<128x32xf32> to vector<128x16xf32>
    %cst_18 = arith.constant 5.000000e-01 : f32
    %29 = vector.broadcast %cst_18 : f32 to vector<128x16xf32>
    %30 = arith.mulf %29, %28 : vector<128x16xf32>
    %31 = math.exp %30 : vector<128x16xf32>
    %32 = arith.mulf %8, %31 : vector<128x16xf32>
    %33 = arith.addf %27, %32 : vector<128x16xf32>
    %34 = arith.truncf %33 : vector<128x16xf32> to vector<128x16xbf16>
    %c0_19 = arith.constant 0 : index
    %c0_20 = arith.constant 0 : index
    %35 = vector.load %arg5[%c0_19, %c0_20] : memref<16x32xbf16, #tpu.memory_space<vmem>>, vector<16x32xbf16>
    %cst_21 = arith.constant dense<0.000000e+00> : vector<128x32xf32>
    %36 = tpu.matmul %34, %35, %cst_21 {dimension_numbers = #tpu.dot_dimension_numbers<[1], [0], [0], [1], [0, 0, 1, 1], [], []>} : vector<128x16xbf16>, vector<16x32xbf16>, vector<128x32xf32> -> vector<128x32xf32>
    %37 = vector.broadcast %3 : vector<1x32xf32> to vector<128x32xf32>
    %38 = arith.addf %36, %37 : vector<128x32xf32>
    %cst_22 = arith.constant 0.000000e+00 : f32
    %39 = vector.broadcast %cst_22 : f32 to vector<128x32xf32>
    %40 = arith.maximumf %38, %39 : vector<128x32xf32>
    %41 = arith.truncf %40 : vector<128x32xf32> to vector<128x32xbf16>
    %c0_23 = arith.constant 0 : index
    %c0_24 = arith.constant 0 : index
    %42 = vector.load %arg6[%c0_23, %c0_24] : memref<32x32xbf16, #tpu.memory_space<vmem>>, vector<32x32xbf16>
    %cst_25 = arith.constant dense<0.000000e+00> : vector<128x32xf32>
    %43 = tpu.matmul %41, %42, %cst_25 {dimension_numbers = #tpu.dot_dimension_numbers<[1], [0], [0], [1], [0, 0, 1, 1], [], []>} : vector<128x32xbf16>, vector<32x32xbf16>, vector<128x32xf32> -> vector<128x32xf32>
    %44 = vector.broadcast %4 : vector<1x32xf32> to vector<128x32xf32>
    %45 = arith.addf %43, %44 : vector<128x32xf32>
    %cst_26 = arith.constant 0.000000e+00 : f32
    %46 = vector.broadcast %cst_26 : f32 to vector<128x32xf32>
    %47 = arith.maximumf %45, %46 : vector<128x32xf32>
    %48 = arith.truncf %47 : vector<128x32xf32> to vector<128x32xbf16>
    %c0_27 = arith.constant 0 : index
    %c0_28 = arith.constant 0 : index
    %49 = vector.load %arg7[%c0_27, %c0_28] : memref<32x64xbf16, #tpu.memory_space<vmem>>, vector<32x64xbf16>
    %cst_29 = arith.constant dense<0.000000e+00> : vector<128x64xf32>
    %50 = tpu.matmul %48, %49, %cst_29 {dimension_numbers = #tpu.dot_dimension_numbers<[1], [0], [0], [1], [0, 0, 1, 1], [], []>} : vector<128x32xbf16>, vector<32x64xbf16>, vector<128x64xf32> -> vector<128x64xf32>
    %51 = vector.broadcast %5 : vector<1x64xf32> to vector<128x64xf32>
    %52 = arith.addf %50, %51 : vector<128x64xf32>
    %53 = arith.negf %52 : vector<128x64xf32>
    %54 = math.exp %53 : vector<128x64xf32>
    %cst_30 = arith.constant 1.000000e+00 : f32
    %55 = vector.broadcast %cst_30 : f32 to vector<128x64xf32>
    %56 = arith.addf %55, %54 : vector<128x64xf32>
    %57 = arith.divf %55, %56 : vector<128x64xf32>
    %58 = tpu.concatenate %57, %26 in 1 : vector<128x64xf32>, vector<128x32xf32> -> vector<128x96xf32>
    %cst_31 = arith.constant 0.000000e+00 : f32
    %59 = vector.broadcast %cst_31 : f32 to vector<128x32xf32>
    %60 = tpu.concatenate %58, %59 in 1 : vector<128x96xf32>, vector<128x32xf32> -> vector<128x128xf32>
    %c0_32 = arith.constant 0 : index
    %c0_33 = arith.constant 0 : index
    %61 = vector.load %arg9[%c0_32, %c0_33] : memref<128x128xf32, #tpu.memory_space<vmem>>, vector<128x128xf32>
    tpu.vector_store %arg9[%c0_32, %c0_33], %60 {strides = array<i32>} : memref<128x128xf32, #tpu.memory_space<vmem>>, vector<128x128xf32>,
    return
  }
  func.func @transform_0(%arg0: i32) -> (i32, i32) {
    %c0_i32 = arith.constant 0 : i32
    %c0_i32_0 = arith.constant 0 : i32
    return %arg0, %c0_i32 : i32, i32
  }
  func.func @transform_1(%arg0: i32) -> (i32, i32) {
    %c0_i32 = arith.constant 0 : i32
    %c0_i32_0 = arith.constant 0 : i32
    %c0_i32_1 = arith.constant 0 : i32
    return %c0_i32, %c0_i32_0 : i32, i32
  }
  func.func @transform_2(%arg0: i32) -> (i32, i32) {
    %c0_i32 = arith.constant 0 : i32
    %c0_i32_0 = arith.constant 0 : i32
    %c0_i32_1 = arith.constant 0 : i32
    return %c0_i32, %c0_i32_0 : i32, i32
  }
  func.func @transform_3(%arg0: i32) -> (i32, i32) {
    %c0_i32 = arith.constant 0 : i32
    %c0_i32_0 = arith.constant 0 : i32
    %c0_i32_1 = arith.constant 0 : i32
    return %c0_i32, %c0_i32_0 : i32, i32
  }
  func.func @transform_4(%arg0: i32) -> (i32, i32) {
    %c0_i32 = arith.constant 0 : i32
    %c0_i32_0 = arith.constant 0 : i32
    %c0_i32_1 = arith.constant 0 : i32
    return %c0_i32, %c0_i32_0 : i32, i32
  }
  func.func @transform_5(%arg0: i32) -> (i32, i32) {
    %c0_i32 = arith.constant 0 : i32
    %c0_i32_0 = arith.constant 0 : i32
    %c0_i32_1 = arith.constant 0 : i32
    return %c0_i32, %c0_i32_0 : i32, i32
  }
  func.func @transform_6(%arg0: i32) -> (i32, i32) {
    %c0_i32 = arith.constant 0 : i32
    %c0_i32_0 = arith.constant 0 : i32
    %c0_i32_1 = arith.constant 0 : i32
    return %c0_i32, %c0_i32_0 : i32, i32
  }
  func.func @transform_7(%arg0: i32) -> (i32, i32) {
    %c0_i32 = arith.constant 0 : i32
    %c0_i32_0 = arith.constant 0 : i32
    %c0_i32_1 = arith.constant 0 : i32
    return %c0_i32, %c0_i32_0 : i32, i32
  }
  func.func @transform_8(%arg0: i32) -> (i32, i32) {
    %c0_i32 = arith.constant 0 : i32
    %c0_i32_0 = arith.constant 0 : i32
    return %arg0, %c0_i32 : i32, i32
  }
}

</mosaic_0001>

<llo_original>
// kernel: vae_forward.1
$region0: #{vae_forward.1}
  #allocation0 [shape = 'u32[]', space=smem, size = 0x4, offset = 0x4, fixed_abs, tag = 'smem constant byte address 0x4 - core index']
  #allocation1 [shape = 'u32[144,128]{1,0:T(1,128)}', space=vmem, size = 0x12000, scoped, tag = 'internal scratch']
  %s0 = inlined_call_operand.vmem [shape: bf16[256,128], index: 0, kind: input, shape index: {}]
  %s1 = inlined_call_operand.vmem [shape: bf16[128,32], index: 1, kind: input, shape index: {}]
  %s2 = inlined_call_operand.vmem [shape: bf16[32,32], index: 2, kind: input, shape index: {}]
  %s3 = inlined_call_operand.vmem [shape: bf16[32,32], index: 3, kind: input, shape index: {}]
  %s4 = inlined_call_operand.vmem [shape: bf16[16,32], index: 4, kind: input, shape index: {}]
  %s5 = inlined_call_operand.vmem [shape: bf16[32,32], index: 5, kind: input, shape index: {}]
  %s6 = inlined_call_operand.vmem [shape: bf16[32,64], index: 6, kind: input, shape index: {}]
  %s7 = inlined_call_operand.vmem [shape: f32[1,224], index: 7, kind: input, shape index: {}]
  %s8 = inlined_call_operand.vmem [shape: f32[256,128], index: 8, kind: output, shape index: {}]
  %s9 = sld [smem:[#allocation0]]
  $region65: #{vae_forward.1} parent=0
    _
  %s11 = ssub.s32 1, %s9
  %s12 = scalar_select 0, %s11, %s9
  loop: start=0, step=1, limit=4
  $region2: #{vae_forward.1} parent=0 // loop_pre_header
    _
  $region3: #{vae_forward.1} parent=0 // loop_header
    %s14 = sphi 0, %s18
    %p15 = scmp.ge.s32.totalorder %s14, 4
    %s24 = sphi 0, %s26
    %s27 = sphi 0, %s24
    %s28 = sphi 0, %s27
    %s44 = sphi 0, %s28
    %s48 = sphi 0, %s48
    %s50 = sphi 0, %s48
    %s51 = sphi 0, %s50
    %s65 = sphi 0, %s51
    %s69 = sphi 0, %s69
    %s71 = sphi 0, %s69
    %s72 = sphi 0, %s71
    %s86 = sphi 0, %s72
    %s90 = sphi 0, %s90
    %s92 = sphi 0, %s90
    %s93 = sphi 0, %s92
    %s107 = sphi 0, %s93
    %s111 = sphi 0, %s111
    %s113 = sphi 0, %s111
    %s114 = sphi 0, %s113
    %s128 = sphi 0, %s114
    %s132 = sphi 0, %s132
    %s134 = sphi 0, %s132
    %s135 = sphi 0, %s134
    %s149 = sphi 0, %s135
    %s153 = sphi 0, %s153
    %s155 = sphi 0, %s153
    %s156 = sphi 0, %s155
    %s170 = sphi 0, %s156
    %s174 = sphi 0, %s174
    %s176 = sphi 0, %s174
    %s177 = sphi 0, %s176
    %s191 = sphi 0, %s177
    %s197 = sphi 0, %s199
    %s200 = sphi 0, %s197
    %s201 = sphi 0, %s200
    %s217 = sphi 0, %s201
  $region4: #{vae_forward.1} parent=0 // loop_header_branch
    %17 = sbr.rel (%p15) target = $region8
  $region5: #{vae_forward.1} parent=0 // loop_body
    %s19 = ssub.s32 %s14, 1
    %s20 = ssub.s32 %s14, 2
    %s21 = sadd.s32 %s14, 1
    %s22 = ssub.s32 %s14, %s21
    %p23 = scmp.eq.s32.totalorder %s22, 0
    %s25 = sadd.s32 %s24, 1
    %s26 = scalar_select %p23, %s24, %s25
    %p29 = pneg %p23
    %p30 = scmp.eq.s32.totalorder %s14, 1
    %p31 = por %p29, %p30
    %p32 = scmp.ne.s32.totalorder %s24, %s27
    %p33 = scmp.eq.s32.totalorder %s14, 0
    %p34 = por %p32, %p33
    %p35 = scmp.ne.s32.totalorder %s24, %s27
    %p36 = scmp.eq.s32.totalorder %s19, 1
    %p37 = por %p35, %p36
    %p38 = scmp.ne.s32.totalorder %s27, %s28
    %p39 = scmp.eq.s32.totalorder %s19, 0
    %p40 = por %p38, %p39
    %p41 = scmp.ne.s32.totalorder %s27, %s28
    %p42 = scmp.eq.s32.totalorder %s20, 1
    %p43 = por %p41, %p42
    %p45 = scmp.ne.s32.totalorder %s28, %s44
    %p46 = scmp.eq.s32.totalorder %s20, 0
    %p47 = por %p45, %p46
    %s49 = sadd.s32 %s48, 1
    %p52 = scmp.eq.s32.totalorder %s14, 1
    %p53 = scmp.ne.s32.totalorder %s48, %s50
    %p54 = scmp.eq.s32.totalorder %s14, 0
    %p55 = por %p53, %p54
    %p56 = scmp.ne.s32.totalorder %s48, %s50
    %p57 = scmp.eq.s32.totalorder %s19, 1
    %p58 = por %p56, %p57
    %p59 = scmp.ne.s32.totalorder %s50, %s51
    %p60 = scmp.eq.s32.totalorder %s19, 0
    %p61 = por %p59, %p60
    %p62 = scmp.ne.s32.totalorder %s50, %s51
    %p63 = scmp.eq.s32.totalorder %s20, 1
    %p64 = por %p62, %p63
    %p66 = scmp.ne.s32.totalorder %s51, %s65
    %p67 = scmp.eq.s32.totalorder %s20, 0
    %p68 = por %p66, %p67
    %s70 = sadd.s32 %s69, 1
    %p73 = scmp.eq.s32.totalorder %s14, 1
    %p74 = scmp.ne.s32.totalorder %s69, %s71
    %p75 = scmp.eq.s32.totalorder %s14, 0
    %p76 = por %p74, %p75
    %p77 = scmp.ne.s32.totalorder %s69, %s71
    %p78 = scmp.eq.s32.totalorder %s19, 1
    %p79 = por %p77, %p78
    %p80 = scmp.ne.s32.totalorder %s71, %s72
    %p81 = scmp.eq.s32.totalorder %s19, 0
    %p82 = por %p80, %p81
    %p83 = scmp.ne.s32.totalorder %s71, %s72
    %p84 = scmp.eq.s32.totalorder %s20, 1
    %p85 = por %p83, %p84
    %p87 = scmp.ne.s32.totalorder %s72, %s86
    %p88 = scmp.eq.s32.totalorder %s20, 0
    %p89 = por %p87, %p88
    %s91 = sadd.s32 %s90, 1
    %p94 = scmp.eq.s32.totalorder %s14, 1
    %p95 = scmp.ne.s32.totalorder %s90, %s92
    %p96 = scmp.eq.s32.totalorder %s14, 0
    %p97 = por %p95, %p96
    %p98 = scmp.ne.s32.totalorder %s90, %s92
    %p99 = scmp.eq.s32.totalorder %s19, 1
    %p100 = por %p98, %p99
    %p101 = scmp.ne.s32.totalorder %s92, %s93
    %p102 = scmp.eq.s32.totalorder %s19, 0
    %p103 = por %p101, %p102
    %p104 = scmp.ne.s32.totalorder %s92, %s93
    %p105 = scmp.eq.s32.totalorder %s20, 1
    %p106 = por %p104, %p105
    %p108 = scmp.ne.s32.totalorder %s93, %s107
    %p109 = scmp.eq.s32.totalorder %s20, 0
    %p110 = por %p108, %p109
    %s112 = sadd.s32 %s111, 1
    %p115 = scmp.eq.s32.totalorder %s14, 1
    %p116 = scmp.ne.s32.totalorder %s111, %s113
    %p117 = scmp.eq.s32.totalorder %s14, 0
    %p118 = por %p116, %p117
    %p119 = scmp.ne.s32.totalorder %s111, %s113
    %p120 = scmp.eq.s32.totalorder %s19, 1
    %p121 = por %p119, %p120
    %p122 = scmp.ne.s32.totalorder %s113, %s114
    %p123 = scmp.eq.s32.totalorder %s19, 0
    %p124 = por %p122, %p123
    %p125 = scmp.ne.s32.totalorder %s113, %s114
    %p126 = scmp.eq.s32.totalorder %s20, 1
    %p127 = por %p125, %p126
    %p129 = scmp.ne.s32.totalorder %s114, %s128
    %p130 = scmp.eq.s32.totalorder %s20, 0
    %p131 = por %p129, %p130
    %s133 = sadd.s32 %s132, 1
    %p136 = scmp.eq.s32.totalorder %s14, 1
    %p137 = scmp.ne.s32.totalorder %s132, %s134
    %p138 = scmp.eq.s32.totalorder %s14, 0
    %p139 = por %p137, %p138
    %p140 = scmp.ne.s32.totalorder %s132, %s134
    %p141 = scmp.eq.s32.totalorder %s19, 1
    %p142 = por %p140, %p141
    %p143 = scmp.ne.s32.totalorder %s134, %s135
    %p144 = scmp.eq.s32.totalorder %s19, 0
    %p145 = por %p143, %p144
    %p146 = scmp.ne.s32.totalorder %s134, %s135
    %p147 = scmp.eq.s32.totalorder %s20, 1
    %p148 = por %p146, %p147
    %p150 = scmp.ne.s32.totalorder %s135, %s149
    %p151 = scmp.eq.s32.totalorder %s20, 0
    %p152 = por %p150, %p151
    %s154 = sadd.s32 %s153, 1
    %p157 = scmp.eq.s32.totalorder %s14, 1
    %p158 = scmp.ne.s32.totalorder %s153, %s155
    %p159 = scmp.eq.s32.totalorder %s14, 0
    %p160 = por %p158, %p159
    %p161 = scmp.ne.s32.totalorder %s153, %s155
    %p162 = scmp.eq.s32.totalorder %s19, 1
    %p163 = por %p161, %p162
    %p164 = scmp.ne.s32.totalorder %s155, %s156
    %p165 = scmp.eq.s32.totalorder %s19, 0
    %p166 = por %p164, %p165
    %p167 = scmp.ne.s32.totalorder %s155, %s156
    %p168 = scmp.eq.s32.totalorder %s20, 1
    %p169 = por %p167, %p168
    %p171 = scmp.ne.s32.totalorder %s156, %s170
    %p172 = scmp.eq.s32.totalorder %s20, 0
    %p173 = por %p171, %p172
    %s175 = sadd.s32 %s174, 1
    %p178 = scmp.eq.s32.totalorder %s14, 1
    %p179 = scmp.ne.s32.totalorder %s174, %s176
    %p180 = scmp.eq.s32.totalorder %s14, 0
    %p181 = por %p179, %p180
    %p182 = scmp.ne.s32.totalorder %s174, %s176
    %p183 = scmp.eq.s32.totalorder %s19, 1
    %p184 = por %p182, %p183
    %p185 = scmp.ne.s32.totalorder %s176, %s177
    %p186 = scmp.eq.s32.totalorder %s19, 0
    %p187 = por %p185, %p186
    %p188 = scmp.ne.s32.totalorder %s176, %s177
    %p189 = scmp.eq.s32.totalorder %s20, 1
    %p190 = por %p188, %p189
    %p192 = scmp.ne.s32.totalorder %s177, %s191
    %p193 = scmp.eq.s32.totalorder %s20, 0
    %p194 = por %p192, %p193
    %s195 = ssub.s32 %s14, %s21
    %p196 = scmp.eq.s32.totalorder %s195, 0
    %s198 = sadd.s32 %s197, 1
    %s199 = scalar_select %p196, %s197, %s198
    %p202 = pneg %p196
    %p203 = scmp.eq.s32.totalorder %s14, 1
    %p204 = por %p202, %p203
    %p205 = scmp.ne.s32.totalorder %s197, %s200
    %p206 = scmp.eq.s32.totalorder %s14, 0
    %p207 = por %p205, %p206
    %p208 = scmp.ne.s32.totalorder %s197, %s200
    %p209 = scmp.eq.s32.totalorder %s19, 1
    %p210 = por %p208, %p209
    %p211 = scmp.ne.s32.totalorder %s200, %s201
    %p212 = scmp.eq.s32.totalorder %s19, 0
    %p213 = por %p211, %p212
    %p214 = scmp.ne.s32.totalorder %s200, %s201
    %p215 = scmp.eq.s32.totalorder %s20, 1
    %p216 = por %p214, %p215
    %p218 = scmp.ne.s32.totalorder %s201, %s217
    %p219 = scmp.eq.s32.totalorder %s20, 0
    %p220 = por %p218, %p219
    %p221 = scmp.le.s32.totalorder 1, %s14
    %p222 = scmp.lt.s32.totalorder %s14, 3
    %p223 = pnand %p221, %p222
    %p224 = pneg %p223
    // Predicated region
    $region9: #{vae_forward.1} parent=5 // pred_check
      _
    $region10: #{vae_forward.1} parent=5 // pred_check_branch
      %226 = sbr.rel (%p223) target = $region12
    $region11: #{vae_forward.1} parent=5 // pred_region
      %s227 = ssub.s32 %s14, 1
      // Predicated region
      $region13: #{vae_forward.1} parent=11 // pred_check
        %p228 = pneg %p61
      $region14: #{vae_forward.1} parent=11 // pred_check_branch
        %230 = sbr.rel (%p228) target = $region16
      $region15: #{vae_forward.1} parent=11 // pred_region
        _
      $region16: #{vae_forward.1} parent=11 // pred_fallthru
        _
      // Predicated region
      $region17: #{vae_forward.1} parent=11 // pred_check
        %p231 = pneg %p82
      $region18: #{vae_forward.1} parent=11 // pred_check_branch
        %233 = sbr.rel (%p231) target = $region20
      $region19: #{vae_forward.1} parent=11 // pred_region
        _
      $region20: #{vae_forward.1} parent=11 // pred_fallthru
        _
      // Predicated region
      $region21: #{vae_forward.1} parent=11 // pred_check
        %p234 = pneg %p103
      $region22: #{vae_forward.1} parent=11 // pred_check_branch
        %236 = sbr.rel (%p234) target = $region24
      $region23: #{vae_forward.1} parent=11 // pred_region
        _
      $region24: #{vae_forward.1} parent=11 // pred_fallthru
        _
      // Predicated region
      $region25: #{vae_forward.1} parent=11 // pred_check
        %p237 = pneg %p124
      $region26: #{vae_forward.1} parent=11 // pred_check_branch
        %239 = sbr.rel (%p237) target = $region28
      $region27: #{vae_forward.1} parent=11 // pred_region
        _
      $region28: #{vae_forward.1} parent=11 // pred_fallthru
        _
      // Predicated region
      $region29: #{vae_forward.1} parent=11 // pred_check
        %p240 = pneg %p145
      $region30: #{vae_forward.1} parent=11 // pred_check_branch
        %242 = sbr.rel (%p240) target = $region32
      $region31: #{vae_forward.1} parent=11 // pred_region
        _
      $region32: #{vae_forward.1} parent=11 // pred_fallthru
        _
      // Predicated region
      $region33: #{vae_forward.1} parent=11 // pred_check
        %p243 = pneg %p166
      $region34: #{vae_forward.1} parent=11 // pred_check_branch
        %245 = sbr.rel (%p243) target = $region36
      $region35: #{vae_forward.1} parent=11 // pred_region
        _
      $region36: #{vae_forward.1} parent=11 // pred_fallthru
        _
      // Predicated region
      $region37: #{vae_forward.1} parent=11 // pred_check
        %p246 = pneg %p187
      $region38: #{vae_forward.1} parent=11 // pred_check_branch
        %248 = sbr.rel (%p246) target = $region40
      $region39: #{vae_forward.1} parent=11 // pred_region
        _
      $region40: #{vae_forward.1} parent=11 // pred_fallthru
        _
    $region12: #{vae_forward.1} parent=5 // pred_fallthru
      _
    %p249 = scmp.lt.s32.totalorder %s14, 2
    // Predicated region
    $region41: #{vae_forward.1} parent=5 // pred_check
      %p250 = pneg %p249
    $region42: #{vae_forward.1} parent=5 // pred_check_branch
      %252 = sbr.rel (%p250) target = $region44
    $region43: #{vae_forward.1} parent=5 // pred_region
      // Predicated region
      $region45: #{vae_forward.1} parent=43 // pred_check
        %p253 = pneg %p34
      $region46: #{vae_forward.1} parent=43 // pred_check_branch
        %255 = sbr.rel (%p253) target = $region48
      $region47: #{vae_forward.1} parent=43 // pred_region
        %s256 = smul.u32 16, %s14
        %p257 = scmp.lt.s32.totalorder %s256, 31
        %s258 = scalar_select %p257, %s256, 31
        %s259 = smul.addr %s258, 4
        %s260 = scalar_lea.vmem %s0, %s259
        %s261 = smul.u32 16, %s14
      $region48: #{vae_forward.1} parent=43 // pred_fallthru
        _
    $region44: #{vae_forward.1} parent=5 // pred_fallthru
      _
    %p262 = scmp.le.s32.totalorder 1, %s14
    %p263 = scmp.lt.s32.totalorder %s14, 3
    %p264 = pnand %p262, %p263
    %p265 = pneg %p264
    // Predicated region
    $region49: #{vae_forward.1} parent=5 // pred_check
      _
    $region50: #{vae_forward.1} parent=5 // pred_check_branch
      %267 = sbr.rel (%p264) target = $region52
    $region51: #{vae_forward.1} parent=5 // pred_region
      %s268 = ssub.s32 %s14, 1
      %s269 = smul.u32 16, %s19
      %p270 = scmp.lt.s32.totalorder %s269, 31
      %s271 = scalar_select %p270, %s269, 31
      %s272 = smul.addr %s271, 4
      %s273 = scalar_lea.vmem %s0, %s272
      %p274 = pneg %p40
      %p275 = pneg %p37
      %p276 = pneg %p61
      %p277 = pneg %p58
      %p278 = pneg %p82
      %p279 = pneg %p79
      %p280 = pneg %p103
      %p281 = pneg %p100
      %p282 = pneg %p124
      %p283 = pneg %p121
      %p284 = pneg %p145
      %p285 = pneg %p142
      %p286 = pneg %p166
      %p287 = pneg %p163
      %p288 = pneg %p187
      %p289 = pneg %p184
      %p290 = pneg %p213
      %p291 = pneg %p210
      %s292 = smul.u32 16, %s19
      %p293 = scmp.lt.s32.totalorder %s292, 31
      %s294 = scalar_select %p293, %s292, 31
      %s295 = smul.addr %s294, 8
      %s296 = scalar_lea.vmem %s8, %s295
      %s297 = smul.u32 16, %s19
      %p298 = scmp.lt.s32.totalorder %s297, 31
      %s299 = scalar_select %p298, %s297, 31
      %s300 = smul.addr %s299, 4
      %s301 = scalar_lea.vmem %s0, %s300
      %s302 = smul.u32 16, %s19
      %s303 = smul.u32 16, %s19
      %p304 = scmp.lt.s32.totalorder %s303, 31
      %s305 = scalar_select %p304, %s303, 31
      %s306 = smul.addr %s305, 8
      %s307 = scalar_lea.vmem %s8, %s306
      %s308 = smul.u32 16, %s19
      %v310 = vld [vmem:[%s7] sm:$0x1]
      %v311 = vld [vmem:[%s7 + $0x1] sm:$0x1]
      %v312 = vld [vmem:[%s301] sm:$0xf]
      %v313 = vld [vmem:[%s301 + $0x4] sm:$0xf]
      %v314 = vld [vmem:[%s301 + $0x8] sm:$0xf]
      %v315 = vld [vmem:[%s301 + $0xc] sm:$0xf]
      %v316 = vld [vmem:[%s301 + $0x10] sm:$0xf]
      %v317 = vld [vmem:[%s301 + $0x14] sm:$0xf]
      %v318 = vld [vmem:[%s301 + $0x18] sm:$0xf]
      %v319 = vld [vmem:[%s301 + $0x1c] sm:$0xf]
      %v320 = vld [vmem:[%s301 + $0x20] sm:$0xf]
      %v321 = vld [vmem:[%s301 + $0x24] sm:$0xf]
      %v322 = vld [vmem:[%s301 + $0x28] sm:$0xf]
      %v323 = vld [vmem:[%s301 + $0x2c] sm:$0xf]
      %v324 = vld [vmem:[%s301 + $0x30] sm:$0xf]
      %v325 = vld [vmem:[%s301 + $0x34] sm:$0xf]
      %v326 = vld [vmem:[%s301 + $0x38] sm:$0xf]
      %v327 = vld [vmem:[%s301 + $0x3c] sm:$0xf]
      %v328 = vunpack.c.l.bf16 %v312
      %v329 = vunpack.c.l.bf16 %v313
      %v330 = vunpack.c.l.bf16 %v314
      %v331 = vunpack.c.l.bf16 %v315
      %v332 = vunpack.c.l.bf16 %v316
      %v333 = vunpack.c.l.bf16 %v317
      %v334 = vunpack.c.l.bf16 %v318
      %v335 = vunpack.c.l.bf16 %v319
      %v336 = vunpack.c.l.bf16 %v320
      %v337 = vunpack.c.l.bf16 %v321
      %v338 = vunpack.c.l.bf16 %v322
      %v339 = vunpack.c.l.bf16 %v323
      %v340 = vunpack.c.l.bf16 %v324
      %v341 = vunpack.c.l.bf16 %v325
      %v342 = vunpack.c.l.bf16 %v326
      %v343 = vunpack.c.l.bf16 %v327
      %v344 = vld [vmem:[%s1] sm:$0xf]
      %v345 = vld [vmem:[%s1 + $0x4] sm:$0xf]
      %v346 = vld [vmem:[%s1 + $0x8] sm:$0xf]
      %v347 = vld [vmem:[%s1 + $0xc] sm:$0xf]
      %v348 = vld [vmem:[%s1 + $0x10] sm:$0xf]
      %v349 = vld [vmem:[%s1 + $0x14] sm:$0xf]
      %v350 = vld [vmem:[%s1 + $0x18] sm:$0xf]
      %v351 = vld [vmem:[%s1 + $0x1c] sm:$0xf]
      %v352 = vld [vmem:[%s1 + $0x20] sm:$0xf]
      %v353 = vld [vmem:[%s1 + $0x24] sm:$0xf]
      %v354 = vld [vmem:[%s1 + $0x28] sm:$0xf]
      %v355 = vld [vmem:[%s1 + $0x2c] sm:$0xf]
      %v356 = vld [vmem:[%s1 + $0x30] sm:$0xf]
      %v357 = vld [vmem:[%s1 + $0x34] sm:$0xf]
      %v358 = vld [vmem:[%s1 + $0x38] sm:$0xf]
      %v359 = vld [vmem:[%s1 + $0x3c] sm:$0xf]
      %v361 = vlaneseq
      %v362 = vshrl.u32 %v361, 7
      %v363 = vsub.s32 0, %v362
      %v364 = vrot.slane %v310, %v363
      %v382 = vunpack.c.l.b16 %v312
      %v383 = vunpack.c.l.b16 %v313
      %v384 = vunpack.c.l.b16 %v314
      %v385 = vunpack.c.l.b16 %v315
      %v386 = vunpack.c.l.b16 %v316
      %v387 = vunpack.c.l.b16 %v317
      %v388 = vunpack.c.l.b16 %v318
      %v389 = vunpack.c.l.b16 %v319
      %v390 = vunpack.c.l.b16 %v320
      %v391 = vunpack.c.l.b16 %v321
      %v392 = vunpack.c.l.b16 %v322
      %v393 = vunpack.c.l.b16 %v323
      %v394 = vunpack.c.l.b16 %v324
      %v395 = vunpack.c.l.b16 %v325
      %v396 = vunpack.c.l.b16 %v326
      %v397 = vunpack.c.l.b16 %v327
      %v398 = vpack.c.b16 %v383, %v382
      %v399 = vpack.c.b16 %v385, %v384
      %v400 = vpack.c.b16 %v387, %v386
      %v401 = vpack.c.b16 %v389, %v388
      %v402 = vpack.c.b16 %v391, %v390
      %v403 = vpack.c.b16 %v393, %v392
      %v404 = vpack.c.b16 %v395, %v394
      %v405 = vpack.c.b16 %v397, %v396
      %v430 = vunpack.c.l.b16 %v344
      %v431 = vunpack.c.l.b16 %v345
      %v432 = vunpack.c.l.b16 %v346
      %v433 = vunpack.c.l.b16 %v347
      %v434 = vunpack.c.l.b16 %v348
      %v435 = vunpack.c.l.b16 %v349
      %v436 = vunpack.c.l.b16 %v350
      %v437 = vunpack.c.l.b16 %v351
      %v438 = vunpack.c.l.b16 %v352
      %v439 = vunpack.c.l.b16 %v353
      %v440 = vunpack.c.l.b16 %v354
      %v441 = vunpack.c.l.b16 %v355
      %v442 = vunpack.c.l.b16 %v356
      %v443 = vunpack.c.l.b16 %v357
      %v444 = vunpack.c.l.b16 %v358
      %v445 = vunpack.c.l.b16 %v359
      %v446 = vpack.c.b16 %v431, %v430
      %v447 = vpack.c.b16 %v433, %v432
      %v448 = vpack.c.b16 %v435, %v434
      %v449 = vpack.c.b16 %v437, %v436
      %v450 = vpack.c.b16 %v439, %v438
      %v451 = vpack.c.b16 %v441, %v440
      %v452 = vpack.c.b16 %v443, %v442
      %v453 = vpack.c.b16 %v445, %v444
      %462 = vmatprep.subr.bf16.mxu0 0
      %463 = vmatpush1.bf16.msra.mxu0 %v446
      %464 = vmatprep.subr.bf16.mxu0 0
      %465 = vmatpush1.bf16.msra.mxu0 %v447
      %466 = vmatprep.subr.bf16.mxu0 0
      %467 = vmatpush1.bf16.msra.mxu0 %v448
      %468 = vmatprep.subr.bf16.mxu0 0
      %469 = vmatpush1.bf16.msra.mxu0 %v449
      %470 = vmatprep.subr.bf16.mxu0 0
      %471 = vmatpush1.bf16.msra.mxu0 %v450
      %472 = vmatprep.subr.bf16.mxu0 0
      %473 = vmatpush1.bf16.msra.mxu0 %v451
      %474 = vmatprep.subr.bf16.mxu0 0
      %475 = vmatpush1.bf16.msra.mxu0 %v452
      %476 = vmatprep.subr.bf16.mxu0 0
      %477 = vmatpush1.bf16.msra.mxu0 %v453
      %478 = vmatprep.subr.bf16.mxu0 0
      %479 = vmatpush1.bf16.msra.mxu0 0
      %480 = vmatprep.subr.bf16.mxu0 0
      %481 = vmatpush1.bf16.msra.mxu0 0
      %482 = vmatprep.subr.bf16.mxu0 0
      %483 = vmatpush1.bf16.msra.mxu0 0
      %484 = vmatprep.subr.bf16.mxu0 0
      %485 = vmatpush1.bf16.msra.mxu0 0
      %486 = vmatprep.subr.bf16.mxu0 0
      %487 = vmatpush1.bf16.msra.mxu0 0
      %488 = vmatprep.subr.bf16.mxu0 0
      %489 = vmatpush1.bf16.msra.mxu0 0
      %490 = vmatprep.subr.bf16.mxu0 0
      %491 = vmatpush1.bf16.msra.mxu0 0
      %492 = vmatprep.subr.bf16.mxu0 0
      %493 = vmatpush1.bf16.msra.mxu0 0
      %494 = vmatprep.mubr.bf16.mxu0 0
      %495 = vmatmul.mubr.bf16.gmra.mrb[0].mxu0 %v398
      %v496 = vpop.f32.mrb[0].mxu0
      %v497 = vadd.f32 %v364, %v496
      %v498 = vpop.f32.mrb[0].mxu0
      %v499 = vpop.f32.mrb[0].mxu0
      %v500 = vadd.f32 %v364, %v499
      %v501 = vpop.f32.mrb[0].mxu0
      %502 = vmatprep.mubr.bf16.mxu0 0
      %503 = vmatmul.mubr.bf16.gmra.mrb[0].mxu0 %v399
      %v504 = vpop.f32.mrb[0].mxu0
      %v505 = vadd.f32 %v364, %v504
      %v506 = vpop.f32.mrb[0].mxu0
      %v507 = vpop.f32.mrb[0].mxu0
      %v508 = vadd.f32 %v364, %v507
      %v509 = vpop.f32.mrb[0].mxu0
      %510 = vmatprep.mubr.bf16.mxu0 0
      %511 = vmatmul.mubr.bf16.gmra.mrb[0].mxu0 %v400
      %v512 = vpop.f32.mrb[0].mxu0
      %v513 = vadd.f32 %v364, %v512
      %v514 = vpop.f32.mrb[0].mxu0
      %v515 = vpop.f32.mrb[0].mxu0
      %v516 = vadd.f32 %v364, %v515
      %v517 = vpop.f32.mrb[0].mxu0
      %518 = vmatprep.mubr.bf16.mxu0 0
      %519 = vmatmul.mubr.bf16.gmra.mrb[0].mxu0 %v401
      %v520 = vpop.f32.mrb[0].mxu0
      %v521 = vadd.f32 %v364, %v520
      %v522 = vpop.f32.mrb[0].mxu0
      %v523 = vpop.f32.mrb[0].mxu0
      %v524 = vadd.f32 %v364, %v523
      %v525 = vpop.f32.mrb[0].mxu0
      %526 = vmatprep.mubr.bf16.mxu0 0
      %527 = vmatmul.mubr.bf16.gmra.mrb[0].mxu0 %v402
      %v528 = vpop.f32.mrb[0].mxu0
      %v529 = vadd.f32 %v364, %v528
      %v530 = vpop.f32.mrb[0].mxu0
      %v531 = vpop.f32.mrb[0].mxu0
      %v532 = vadd.f32 %v364, %v531
      %v533 = vpop.f32.mrb[0].mxu0
      %534 = vmatprep.mubr.bf16.mxu0 0
      %535 = vmatmul.mubr.bf16.gmra.mrb[0].mxu0 %v403
      %v536 = vpop.f32.mrb[0].mxu0
      %v537 = vadd.f32 %v364, %v536
      %v538 = vpop.f32.mrb[0].mxu0
      %v539 = vpop.f32.mrb[0].mxu0
      %v540 = vadd.f32 %v364, %v539
      %v541 = vpop.f32.mrb[0].mxu0
      %542 = vmatprep.mubr.bf16.mxu0 0
      %543 = vmatmul.mubr.bf16.gmra.mrb[0].mxu0 %v404
      %v544 = vpop.f32.mrb[0].mxu0
      %v545 = vadd.f32 %v364, %v544
      %v546 = vpop.f32.mrb[0].mxu0
      %v547 = vpop.f32.mrb[0].mxu0
      %v548 = vadd.f32 %v364, %v547
      %v549 = vpop.f32.mrb[0].mxu0
      %550 = vmatprep.mubr.bf16.mxu0 0
      %551 = vmatmul.mubr.bf16.gmra.mrb[0].mxu0 %v405
      %v552 = vpop.f32.mrb[0].mxu0
      %v553 = vadd.f32 %v364, %v552
      %v554 = vpop.f32.mrb[0].mxu0
      %v555 = vpop.f32.mrb[0].mxu0
      %v556 = vadd.f32 %v364, %v555
      %v557 = vpop.f32.mrb[0].mxu0
      %558 = vdwg.mxu0
      %v559 = vmax.f32 %v497, 0.0
      %v560 = vmax.f32 %v500, 0.0
      %v561 = vmax.f32 %v505, 0.0
      %v562 = vmax.f32 %v508, 0.0
      %v563 = vmax.f32 %v513, 0.0
      %v564 = vmax.f32 %v516, 0.0
      %v565 = vmax.f32 %v521, 0.0
      %v566 = vmax.f32 %v524, 0.0
      %v567 = vmax.f32 %v529, 0.0
      %v568 = vmax.f32 %v532, 0.0
      %v569 = vmax.f32 %v537, 0.0
      %v570 = vmax.f32 %v540, 0.0
      %v571 = vmax.f32 %v545, 0.0
      %v572 = vmax.f32 %v548, 0.0
      %v573 = vmax.f32 %v553, 0.0
      %v574 = vmax.f32 %v556, 0.0
      %v575 = vpack.c.bf16 %v560, %v559
      %v576 = vpack.c.bf16 %v562, %v561
      %v577 = vpack.c.bf16 %v564, %v563
      %v578 = vpack.c.bf16 %v566, %v565
      %v579 = vpack.c.bf16 %v568, %v567
      %v580 = vpack.c.bf16 %v570, %v569
      %v581 = vpack.c.bf16 %v572, %v571
      %v582 = vpack.c.bf16 %v574, %v573
      %v583 = vld [vmem:[%s2] sm:$0xf]
      %v584 = vld [vmem:[%s2 + $0x4] sm:$0xf]
      %v585 = vld [vmem:[%s2 + $0x8] sm:$0xf]
      %v586 = vld [vmem:[%s2 + $0xc] sm:$0xf]
      %v591 = vunpack.c.l.b16 %v583
      %v592 = vunpack.c.l.b16 %v584
      %v593 = vunpack.c.l.b16 %v585
      %v594 = vunpack.c.l.b16 %v586
      %v595 = vpack.c.b16 %v592, %v591
      %v596 = vpack.c.b16 %v594, %v593
      %599 = vrot.lane.b32.xlu0 %v364, 96
      %v600 = vpop.permute.xlu0 %599
      %vm602 = vcmask 261120
      %v604 = vsel %vm602, %v575, 0
      %v607 = vsel %vm602, %v576, 0
      %v610 = vsel %vm602, %v577, 0
      %v613 = vsel %vm602, %v578, 0
      %v616 = vsel %vm602, %v579, 0
      %v619 = vsel %vm602, %v580, 0
      %v622 = vsel %vm602, %v581, 0
      %v625 = vsel %vm602, %v582, 0
      %627 = vmatprep.subr.bf16.mxu0 0
      %628 = vmatpush1.bf16.msra.mxu0 %v595
      %629 = vmatprep.subr.bf16.mxu0 0
      %630 = vmatpush1.bf16.msra.mxu0 %v596
      %631 = vmatprep.subr.bf16.mxu0 0
      %632 = vmatpush1.bf16.msra.mxu0 0
      %633 = vmatprep.subr.bf16.mxu0 0
      %634 = vmatpush1.bf16.msra.mxu0 0
      %635 = vmatprep.subr.bf16.mxu0 0
      %636 = vmatpush1.bf16.msra.mxu0 0
      %637 = vmatprep.subr.bf16.mxu0 0
      %638 = vmatpush1.bf16.msra.mxu0 0
      %639 = vmatprep.subr.bf16.mxu0 0
      %640 = vmatpush1.bf16.msra.mxu0 0
      %641 = vmatprep.subr.bf16.mxu0 0
      %642 = vmatpush1.bf16.msra.mxu0 0
      %643 = vmatprep.subr.bf16.mxu0 0
      %644 = vmatpush1.bf16.msra.mxu0 0
      %645 = vmatprep.subr.bf16.mxu0 0
      %646 = vmatpush1.bf16.msra.mxu0 0
      %647 = vmatprep.subr.bf16.mxu0 0
      %648 = vmatpush1.bf16.msra.mxu0 0
      %649 = vmatprep.subr.bf16.mxu0 0
      %650 = vmatpush1.bf16.msra.mxu0 0
      %651 = vmatprep.subr.bf16.mxu0 0
      %652 = vmatpush1.bf16.msra.mxu0 0
      %653 = vmatprep.subr.bf16.mxu0 0
      %654 = vmatpush1.bf16.msra.mxu0 0
      %655 = vmatprep.subr.bf16.mxu0 0
      %656 = vmatpush1.bf16.msra.mxu0 0
      %657 = vmatprep.subr.bf16.mxu0 0
      %658 = vmatpush1.bf16.msra.mxu0 0
      %659 = vmatprep.mubr.bf16.mxu0 0
      %660 = vmatmul.mubr.bf16.gmra.mrb[0].mxu0 %v604
      %v661 = vpop.f32.mrb[0].mxu0
      %v662 = vadd.f32 %v600, %v661
      %v663 = vpop.f32.mrb[0].mxu0
      %v664 = vpop.f32.mrb[0].mxu0
      %v665 = vadd.f32 %v600, %v664
      %v666 = vpop.f32.mrb[0].mxu0
      %667 = vmatprep.mubr.bf16.mxu0 0
      %668 = vmatmul.mubr.bf16.gmra.mrb[0].mxu0 %v607
      %v669 = vpop.f32.mrb[0].mxu0
      %v670 = vadd.f32 %v600, %v669
      %v671 = vpop.f32.mrb[0].mxu0
      %v672 = vpop.f32.mrb[0].mxu0
      %v673 = vadd.f32 %v600, %v672
      %v674 = vpop.f32.mrb[0].mxu0
      %675 = vmatprep.mubr.bf16.mxu0 0
      %676 = vmatmul.mubr.bf16.gmra.mrb[0].mxu0 %v610
      %v677 = vpop.f32.mrb[0].mxu0
      %v678 = vadd.f32 %v600, %v677
      %v679 = vpop.f32.mrb[0].mxu0
      %v680 = vpop.f32.mrb[0].mxu0
      %v681 = vadd.f32 %v600, %v680
      %v682 = vpop.f32.mrb[0].mxu0
      %683 = vmatprep.mubr.bf16.mxu0 0
      %684 = vmatmul.mubr.bf16.gmra.mrb[0].mxu0 %v613
      %v685 = vpop.f32.mrb[0].mxu0
      %v686 = vadd.f32 %v600, %v685
      %v687 = vpop.f32.mrb[0].mxu0
      %v688 = vpop.f32.mrb[0].mxu0
      %v689 = vadd.f32 %v600, %v688
      %v690 = vpop.f32.mrb[0].mxu0
      %691 = vmatprep.mubr.bf16.mxu0 0
      %692 = vmatmul.mubr.bf16.gmra.mrb[0].mxu0 %v616
      %v693 = vpop.f32.mrb[0].mxu0
      %v694 = vadd.f32 %v600, %v693
      %v695 = vpop.f32.mrb[0].mxu0
      %v696 = vpop.f32.mrb[0].mxu0
      %v697 = vadd.f32 %v600, %v696
      %v698 = vpop.f32.mrb[0].mxu0
      %699 = vmatprep.mubr.bf16.mxu0 0
      %700 = vmatmul.mubr.bf16.gmra.mrb[0].mxu0 %v619
      %v701 = vpop.f32.mrb[0].mxu0
      %v702 = vadd.f32 %v600, %v701
      %v703 = vpop.f32.mrb[0].mxu0
      %v704 = vpop.f32.mrb[0].mxu0
      %v705 = vadd.f32 %v600, %v704
      %v706 = vpop.f32.mrb[0].mxu0
      %707 = vmatprep.mubr.bf16.mxu0 0
      %708 = vmatmul.mubr.bf16.gmra.mrb[0].mxu0 %v622
      %v709 = vpop.f32.mrb[0].mxu0
      %v710 = vadd.f32 %v600, %v709
      %v711 = vpop.f32.mrb[0].mxu0
      %v712 = vpop.f32.mrb[0].mxu0
      %v713 = vadd.f32 %v600, %v712
      %v714 = vpop.f32.mrb[0].mxu0
      %715 = vmatprep.mubr.bf16.mxu0 0
      %716 = vmatmul.mubr.bf16.gmra.mrb[0].mxu0 %v625
      %v717 = vpop.f32.mrb[0].mxu0
      %v718 = vadd.f32 %v600, %v717
      %v719 = vpop.f32.mrb[0].mxu0
      %v720 = vpop.f32.mrb[0].mxu0
      %v721 = vadd.f32 %v600, %v720
      %v722 = vpop.f32.mrb[0].mxu0
      %723 = vdwg.mxu0
      %v724 = vmax.f32 %v662, 0.0
      %v725 = vmax.f32 %v665, 0.0
      %v726 = vmax.f32 %v670, 0.0
      %v727 = vmax.f32 %v673, 0.0
      %v728 = vmax.f32 %v678, 0.0
      %v729 = vmax.f32 %v681, 0.0
      %v730 = vmax.f32 %v686, 0.0
      %v731 = vmax.f32 %v689, 0.0
      %v732 = vmax.f32 %v694, 0.0
      %v733 = vmax.f32 %v697, 0.0
      %v734 = vmax.f32 %v702, 0.0
      %v735 = vmax.f32 %v705, 0.0
      %v736 = vmax.f32 %v710, 0.0
      %v737 = vmax.f32 %v713, 0.0
      %v738 = vmax.f32 %v718, 0.0
      %v739 = vmax.f32 %v721, 0.0
      %v740 = vpack.c.bf16 %v725, %v724
      %v741 = vpack.c.bf16 %v727, %v726
      %v742 = vpack.c.bf16 %v729, %v728
      %v743 = vpack.c.bf16 %v731, %v730
      %v744 = vpack.c.bf16 %v733, %v732
      %v745 = vpack.c.bf16 %v735, %v734
      %v746 = vpack.c.bf16 %v737, %v736
      %v747 = vpack.c.bf16 %v739, %v738
      %v748 = vld [vmem:[%s3] sm:$0xf]
      %v749 = vld [vmem:[%s3 + $0x4] sm:$0xf]
      %v750 = vld [vmem:[%s3 + $0x8] sm:$0xf]
      %v751 = vld [vmem:[%s3 + $0xc] sm:$0xf]
      %v756 = vunpack.c.l.b16 %v748
      %v757 = vunpack.c.l.b16 %v749
      %v758 = vunpack.c.l.b16 %v750
      %v759 = vunpack.c.l.b16 %v751
      %v760 = vpack.c.b16 %v757, %v756
      %v761 = vpack.c.b16 %v759, %v758
      %764 = vrot.lane.b32.xlu0 %v364, 64
      %v765 = vpop.permute.xlu0 %764
      %v768 = vsel %vm602, %v740, 0
      %v771 = vsel %vm602, %v741, 0
      %v774 = vsel %vm602, %v742, 0
      %v777 = vsel %vm602, %v743, 0
      %v780 = vsel %vm602, %v744, 0
      %v783 = vsel %vm602, %v745, 0
      %v786 = vsel %vm602, %v746, 0
      %v789 = vsel %vm602, %v747, 0
      %791 = vmatprep.subr.bf16.mxu0 0
      %792 = vmatpush1.bf16.msra.mxu0 %v760
      %793 = vmatprep.subr.bf16.mxu0 0
      %794 = vmatpush1.bf16.msra.mxu0 %v761
      %795 = vmatprep.subr.bf16.mxu0 0
      %796 = vmatpush1.bf16.msra.mxu0 0
      %797 = vmatprep.subr.bf16.mxu0 0
      %798 = vmatpush1.bf16.msra.mxu0 0
      %799 = vmatprep.subr.bf16.mxu0 0
      %800 = vmatpush1.bf16.msra.mxu0 0
      %801 = vmatprep.subr.bf16.mxu0 0
      %802 = vmatpush1.bf16.msra.mxu0 0
      %803 = vmatprep.subr.bf16.mxu0 0
      %804 = vmatpush1.bf16.msra.mxu0 0
      %805 = vmatprep.subr.bf16.mxu0 0
      %806 = vmatpush1.bf16.msra.mxu0 0
      %807 = vmatprep.subr.bf16.mxu0 0
      %808 = vmatpush1.bf16.msra.mxu0 0
      %809 = vmatprep.subr.bf16.mxu0 0
      %810 = vmatpush1.bf16.msra.mxu0 0
      %811 = vmatprep.subr.bf16.mxu0 0
      %812 = vmatpush1.bf16.msra.mxu0 0
      %813 = vmatprep.subr.bf16.mxu0 0
      %814 = vmatpush1.bf16.msra.mxu0 0
      %815 = vmatprep.subr.bf16.mxu0 0
      %816 = vmatpush1.bf16.msra.mxu0 0
      %817 = vmatprep.subr.bf16.mxu0 0
      %818 = vmatpush1.bf16.msra.mxu0 0
      %819 = vmatprep.subr.bf16.mxu0 0
      %820 = vmatpush1.bf16.msra.mxu0 0
      %821 = vmatprep.subr.bf16.mxu0 0
      %822 = vmatpush1.bf16.msra.mxu0 0
      %823 = vmatprep.mubr.bf16.mxu0 0
      %824 = vmatmul.mubr.bf16.gmra.mrb[0].mxu0 %v768
      %v825 = vpop.f32.mrb[0].mxu0
      %v826 = vadd.f32 %v765, %v825
      %v827 = vpop.f32.mrb[0].mxu0
      %v828 = vpop.f32.mrb[0].mxu0
      %v829 = vadd.f32 %v765, %v828
      %v830 = vpop.f32.mrb[0].mxu0
      %831 = vmatprep.mubr.bf16.mxu0 0
      %832 = vmatmul.mubr.bf16.gmra.mrb[0].mxu0 %v771
      %v833 = vpop.f32.mrb[0].mxu0
      %v834 = vadd.f32 %v765, %v833
      %v835 = vpop.f32.mrb[0].mxu0
      %v836 = vpop.f32.mrb[0].mxu0
      %v837 = vadd.f32 %v765, %v836
      %v838 = vpop.f32.mrb[0].mxu0
      %839 = vmatprep.mubr.bf16.mxu0 0
      %840 = vmatmul.mubr.bf16.gmra.mrb[0].mxu0 %v774
      %v841 = vpop.f32.mrb[0].mxu0
      %v842 = vadd.f32 %v765, %v841
      %v843 = vpop.f32.mrb[0].mxu0
      %v844 = vpop.f32.mrb[0].mxu0
      %v845 = vadd.f32 %v765, %v844
      %v846 = vpop.f32.mrb[0].mxu0
      %847 = vmatprep.mubr.bf16.mxu0 0
      %848 = vmatmul.mubr.bf16.gmra.mrb[0].mxu0 %v777
      %v849 = vpop.f32.mrb[0].mxu0
      %v850 = vadd.f32 %v765, %v849
      %v851 = vpop.f32.mrb[0].mxu0
      %v852 = vpop.f32.mrb[0].mxu0
      %v853 = vadd.f32 %v765, %v852
      %v854 = vpop.f32.mrb[0].mxu0
      %855 = vmatprep.mubr.bf16.mxu0 0
      %856 = vmatmul.mubr.bf16.gmra.mrb[0].mxu0 %v780
      %v857 = vpop.f32.mrb[0].mxu0
      %v858 = vadd.f32 %v765, %v857
      %v859 = vpop.f32.mrb[0].mxu0
      %v860 = vpop.f32.mrb[0].mxu0
      %v861 = vadd.f32 %v765, %v860
      %v862 = vpop.f32.mrb[0].mxu0
      %863 = vmatprep.mubr.bf16.mxu0 0
      %864 = vmatmul.mubr.bf16.gmra.mrb[0].mxu0 %v783
      %v865 = vpop.f32.mrb[0].mxu0
      %v866 = vadd.f32 %v765, %v865
      %v867 = vpop.f32.mrb[0].mxu0
      %v868 = vpop.f32.mrb[0].mxu0
      %v869 = vadd.f32 %v765, %v868
      %v870 = vpop.f32.mrb[0].mxu0
      %871 = vmatprep.mubr.bf16.mxu0 0
      %872 = vmatmul.mubr.bf16.gmra.mrb[0].mxu0 %v786
      %v873 = vpop.f32.mrb[0].mxu0
      %v874 = vadd.f32 %v765, %v873
      %v875 = vpop.f32.mrb[0].mxu0
      %v876 = vpop.f32.mrb[0].mxu0
      %v877 = vadd.f32 %v765, %v876
      %v878 = vpop.f32.mrb[0].mxu0
      %879 = vmatprep.mubr.bf16.mxu0 0
      %880 = vmatmul.mubr.bf16.gmra.mrb[0].mxu0 %v789
      %v881 = vpop.f32.mrb[0].mxu0
      %v882 = vadd.f32 %v765, %v881
      %v883 = vpop.f32.mrb[0].mxu0
      %v884 = vpop.f32.mrb[0].mxu0
      %v885 = vadd.f32 %v765, %v884
      %v886 = vpop.f32.mrb[0].mxu0
      %887 = vdwg.mxu0
      %v888 = vmul.f32 %v826, 0.5
      %v889 = vmul.f32 %v829, 0.5
      %v890 = vmul.f32 %v834, 0.5
      %v891 = vmul.f32 %v837, 0.5
      %v892 = vmul.f32 %v842, 0.5
      %v893 = vmul.f32 %v845, 0.5
      %v894 = vmul.f32 %v850, 0.5
      %v895 = vmul.f32 %v853, 0.5
      %v896 = vmul.f32 %v858, 0.5
      %v897 = vmul.f32 %v861, 0.5
      %v898 = vmul.f32 %v866, 0.5
      %v899 = vmul.f32 %v869, 0.5
      %v900 = vmul.f32 %v874, 0.5
      %v901 = vmul.f32 %v877, 0.5
      %v902 = vmul.f32 %v882, 0.5
      %v903 = vmul.f32 %v885, 0.5
      %v904 = vmul.f32 %v888, 1.442695
      %v905 = vpow.pop %v904
      %v906 = vmul.f32 %v889, 1.442695
      %v907 = vpow.pop %v906
      %v908 = vmul.f32 %v890, 1.442695
      %v909 = vpow.pop %v908
      %v910 = vmul.f32 %v891, 1.442695
      %v911 = vpow.pop %v910
      %v912 = vmul.f32 %v892, 1.442695
      %v913 = vpow.pop %v912
      %v914 = vmul.f32 %v893, 1.442695
      %v915 = vpow.pop %v914
      %v916 = vmul.f32 %v894, 1.442695
      %v917 = vpow.pop %v916
      %v918 = vmul.f32 %v895, 1.442695
      %v919 = vpow.pop %v918
      %v920 = vmul.f32 %v896, 1.442695
      %v921 = vpow.pop %v920
      %v922 = vmul.f32 %v897, 1.442695
      %v923 = vpow.pop %v922
      %v924 = vmul.f32 %v898, 1.442695
      %v925 = vpow.pop %v924
      %v926 = vmul.f32 %v899, 1.442695
      %v927 = vpow.pop %v926
      %v928 = vmul.f32 %v900, 1.442695
      %v929 = vpow.pop %v928
      %v930 = vmul.f32 %v901, 1.442695
      %v931 = vpow.pop %v930
      %v932 = vmul.f32 %v902, 1.442695
      %v933 = vpow.pop %v932
      %v934 = vmul.f32 %v903, 1.442695
      %v935 = vpow.pop %v934
      %952 = vrot.lane.b32.xlu0 %v905, 48
      %v953 = vpop.permute.xlu0 %952
      %954 = vrot.lane.b32.xlu0 %v907, 48
      %v955 = vpop.permute.xlu0 %954
      %956 = vrot.lane.b32.xlu0 %v909, 48
      %v957 = vpop.permute.xlu0 %956
      %958 = vrot.lane.b32.xlu0 %v911, 48
      %v959 = vpop.permute.xlu0 %958
      %960 = vrot.lane.b32.xlu0 %v913, 48
      %v961 = vpop.permute.xlu0 %960
      %962 = vrot.lane.b32.xlu0 %v915, 48
      %v963 = vpop.permute.xlu0 %962
      %964 = vrot.lane.b32.xlu0 %v917, 48
      %v965 = vpop.permute.xlu0 %964
      %966 = vrot.lane.b32.xlu0 %v919, 48
      %v967 = vpop.permute.xlu0 %966
      %968 = vrot.lane.b32.xlu0 %v921, 48
      %v969 = vpop.permute.xlu0 %968
      %970 = vrot.lane.b32.xlu0 %v923, 48
      %v971 = vpop.permute.xlu0 %970
      %972 = vrot.lane.b32.xlu0 %v925, 48
      %v973 = vpop.permute.xlu0 %972
      %974 = vrot.lane.b32.xlu0 %v927, 48
      %v975 = vpop.permute.xlu0 %974
      %976 = vrot.lane.b32.xlu0 %v929, 48
      %v977 = vpop.permute.xlu0 %976
      %978 = vrot.lane.b32.xlu0 %v931, 48
      %v979 = vpop.permute.xlu0 %978
      %980 = vrot.lane.b32.xlu0 %v933, 48
      %v981 = vpop.permute.xlu0 %980
      %982 = vrot.lane.b32.xlu0 %v935, 48
      %v983 = vpop.permute.xlu0 %982
      %v1000 = vmul.f32 %v328, %v953
      %v1001 = vmul.f32 %v329, %v955
      %v1002 = vmul.f32 %v330, %v957
      %v1003 = vmul.f32 %v331, %v959
      %v1004 = vmul.f32 %v332, %v961
      %v1005 = vmul.f32 %v333, %v963
      %v1006 = vmul.f32 %v334, %v965
      %v1007 = vmul.f32 %v335, %v967
      %v1008 = vmul.f32 %v336, %v969
      %v1009 = vmul.f32 %v337, %v971
      %v1010 = vmul.f32 %v338, %v973
      %v1011 = vmul.f32 %v339, %v975
      %v1012 = vmul.f32 %v340, %v977
      %v1013 = vmul.f32 %v341, %v979
      %v1014 = vmul.f32 %v342, %v981
      %v1015 = vmul.f32 %v343, %v983
      %1032 = vrot.lane.b32.xlu0 %v1000, 64
      %v1033 = vpop.permute.xlu0 %1032
      %1034 = vrot.lane.b32.xlu0 %v1001, 64
      %v1035 = vpop.permute.xlu0 %1034
      %1036 = vrot.lane.b32.xlu0 %v1002, 64
      %v1037 = vpop.permute.xlu0 %1036
      %1038 = vrot.lane.b32.xlu0 %v1003, 64
      %v1039 = vpop.permute.xlu0 %1038
      %1040 = vrot.lane.b32.xlu0 %v1004, 64
      %v1041 = vpop.permute.xlu0 %1040
      %1042 = vrot.lane.b32.xlu0 %v1005, 64
      %v1043 = vpop.permute.xlu0 %1042
      %1044 = vrot.lane.b32.xlu0 %v1006, 64
      %v1045 = vpop.permute.xlu0 %1044
      %1046 = vrot.lane.b32.xlu0 %v1007, 64
      %v1047 = vpop.permute.xlu0 %1046
      %1048 = vrot.lane.b32.xlu0 %v1008, 64
      %v1049 = vpop.permute.xlu0 %1048
      %1050 = vrot.lane.b32.xlu0 %v1009, 64
      %v1051 = vpop.permute.xlu0 %1050
      %1052 = vrot.lane.b32.xlu0 %v1010, 64
      %v1053 = vpop.permute.xlu0 %1052
      %1054 = vrot.lane.b32.xlu0 %v1011, 64
      %v1055 = vpop.permute.xlu0 %1054
      %1056 = vrot.lane.b32.xlu0 %v1012, 64
      %v1057 = vpop.permute.xlu0 %1056
      %1058 = vrot.lane.b32.xlu0 %v1013, 64
      %v1059 = vpop.permute.xlu0 %1058
      %1060 = vrot.lane.b32.xlu0 %v1014, 64
      %v1061 = vpop.permute.xlu0 %1060
      %1062 = vrot.lane.b32.xlu0 %v1015, 64
      %v1063 = vpop.permute.xlu0 %1062
      %v1080 = vadd.f32 %v826, %v1033
      %v1081 = vadd.f32 %v829, %v1035
      %v1082 = vadd.f32 %v834, %v1037
      %v1083 = vadd.f32 %v837, %v1039
      %v1084 = vadd.f32 %v842, %v1041
      %v1085 = vadd.f32 %v845, %v1043
      %v1086 = vadd.f32 %v850, %v1045
      %v1087 = vadd.f32 %v853, %v1047
      %v1088 = vadd.f32 %v858, %v1049
      %v1089 = vadd.f32 %v861, %v1051
      %v1090 = vadd.f32 %v866, %v1053
      %v1091 = vadd.f32 %v869, %v1055
      %v1092 = vadd.f32 %v874, %v1057
      %v1093 = vadd.f32 %v877, %v1059
      %v1094 = vadd.f32 %v882, %v1061
      %v1095 = vadd.f32 %v885, %v1063
      %v1096 = vpack.c.bf16 %v1081, %v1080
      %v1097 = vpack.c.bf16 %v1083, %v1082
      %v1098 = vpack.c.bf16 %v1085, %v1084
      %v1099 = vpack.c.bf16 %v1087, %v1086
      %v1100 = vpack.c.bf16 %v1089, %v1088
      %v1101 = vpack.c.bf16 %v1091, %v1090
      %v1102 = vpack.c.bf16 %v1093, %v1092
      %v1103 = vpack.c.bf16 %v1095, %v1094
      %v1104 = vld [vmem:[%s4] sm:$0xf]
      %v1105 = vld [vmem:[%s4 + $0x4] sm:$0xf]
      %v1108 = vunpack.c.l.b16 %v1104
      %v1109 = vunpack.c.l.b16 %v1105
      %v1110 = vpack.c.b16 %v1109, %v1108
      %1112 = vrot.lane.b32.xlu0 %v364, 32
      %v1113 = vpop.permute.xlu0 %1112
      %vm1115 = vcmask 130048
      %v1117 = vsel %vm1115, %v1096, 0
      %v1120 = vsel %vm1115, %v1097, 0
      %v1123 = vsel %vm1115, %v1098, 0
      %v1126 = vsel %vm1115, %v1099, 0
      %v1129 = vsel %vm1115, %v1100, 0
      %v1132 = vsel %vm1115, %v1101, 0
      %v1135 = vsel %vm1115, %v1102, 0
      %v1138 = vsel %vm1115, %v1103, 0
      %1140 = vmatprep.subr.bf16.mxu0 0
      %1141 = vmatpush1.bf16.msra.mxu0 %v1110
      %1142 = vmatprep.subr.bf16.mxu0 0
      %1143 = vmatpush1.bf16.msra.mxu0 0
      %1144 = vmatprep.subr.bf16.mxu0 0
      %1145 = vmatpush1.bf16.msra.mxu0 0
      %1146 = vmatprep.subr.bf16.mxu0 0
      %1147 = vmatpush1.bf16.msra.mxu0 0
      %1148 = vmatprep.subr.bf16.mxu0 0
      %1149 = vmatpush1.bf16.msra.mxu0 0
      %1150 = vmatprep.subr.bf16.mxu0 0
      %1151 = vmatpush1.bf16.msra.mxu0 0
      %1152 = vmatprep.subr.bf16.mxu0 0
      %1153 = vmatpush1.bf16.msra.mxu0 0
      %1154 = vmatprep.subr.bf16.mxu0 0
      %1155 = vmatpush1.bf16.msra.mxu0 0
      %1156 = vmatprep.subr.bf16.mxu0 0
      %1157 = vmatpush1.bf16.msra.mxu0 0
      %1158 = vmatprep.subr.bf16.mxu0 0
      %1159 = vmatpush1.bf16.msra.mxu0 0
      %1160 = vmatprep.subr.bf16.mxu0 0
      %1161 = vmatpush1.bf16.msra.mxu0 0
      %1162 = vmatprep.subr.bf16.mxu0 0
      %1163 = vmatpush1.bf16.msra.mxu0 0
      %1164 = vmatprep.subr.bf16.mxu0 0
      %1165 = vmatpush1.bf16.msra.mxu0 0
      %1166 = vmatprep.subr.bf16.mxu0 0
      %1167 = vmatpush1.bf16.msra.mxu0 0
      %1168 = vmatprep.subr.bf16.mxu0 0
      %1169 = vmatpush1.bf16.msra.mxu0 0
      %1170 = vmatprep.subr.bf16.mxu0 0
      %1171 = vmatpush1.bf16.msra.mxu0 0
      %1172 = vmatprep.mubr.bf16.mxu0 0
      %1173 = vmatmul.mubr.bf16.gmra.mrb[0].mxu0 %v1117
      %v1174 = vpop.f32.mrb[0].mxu0
      %v1175 = vadd.f32 %v1113, %v1174
      %v1176 = vpop.f32.mrb[0].mxu0
      %v1177 = vpop.f32.mrb[0].mxu0
      %v1178 = vadd.f32 %v1113, %v1177
      %v1179 = vpop.f32.mrb[0].mxu0
      %1180 = vmatprep.mubr.bf16.mxu0 0
      %1181 = vmatmul.mubr.bf16.gmra.mrb[0].mxu0 %v1120
      %v1182 = vpop.f32.mrb[0].mxu0
      %v1183 = vadd.f32 %v1113, %v1182
      %v1184 = vpop.f32.mrb[0].mxu0
      %v1185 = vpop.f32.mrb[0].mxu0
      %v1186 = vadd.f32 %v1113, %v1185
      %v1187 = vpop.f32.mrb[0].mxu0
      %1188 = vmatprep.mubr.bf16.mxu0 0
      %1189 = vmatmul.mubr.bf16.gmra.mrb[0].mxu0 %v1123
      %v1190 = vpop.f32.mrb[0].mxu0
      %v1191 = vadd.f32 %v1113, %v1190
      %v1192 = vpop.f32.mrb[0].mxu0
      %v1193 = vpop.f32.mrb[0].mxu0
      %v1194 = vadd.f32 %v1113, %v1193
      %v1195 = vpop.f32.mrb[0].mxu0
      %1196 = vmatprep.mubr.bf16.mxu0 0
      %1197 = vmatmul.mubr.bf16.gmra.mrb[0].mxu0 %v1126
      %v1198 = vpop.f32.mrb[0].mxu0
      %v1199 = vadd.f32 %v1113, %v1198
      %v1200 = vpop.f32.mrb[0].mxu0
      %v1201 = vpop.f32.mrb[0].mxu0
      %v1202 = vadd.f32 %v1113, %v1201
      %v1203 = vpop.f32.mrb[0].mxu0
      %1204 = vmatprep.mubr.bf16.mxu0 0
      %1205 = vmatmul.mubr.bf16.gmra.mrb[0].mxu0 %v1129
      %v1206 = vpop.f32.mrb[0].mxu0
      %v1207 = vadd.f32 %v1113, %v1206
      %v1208 = vpop.f32.mrb[0].mxu0
      %v1209 = vpop.f32.mrb[0].mxu0
      %v1210 = vadd.f32 %v1113, %v1209
      %v1211 = vpop.f32.mrb[0].mxu0
      %1212 = vmatprep.mubr.bf16.mxu0 0
      %1213 = vmatmul.mubr.bf16.gmra.mrb[0].mxu0 %v1132
      %v1214 = vpop.f32.mrb[0].mxu0
      %v1215 = vadd.f32 %v1113, %v1214
      %v1216 = vpop.f32.mrb[0].mxu0
      %v1217 = vpop.f32.mrb[0].mxu0
      %v1218 = vadd.f32 %v1113, %v1217
      %v1219 = vpop.f32.mrb[0].mxu0
      %1220 = vmatprep.mubr.bf16.mxu0 0
      %1221 = vmatmul.mubr.bf16.gmra.mrb[0].mxu0 %v1135
      %v1222 = vpop.f32.mrb[0].mxu0
      %v1223 = vadd.f32 %v1113, %v1222
      %v1224 = vpop.f32.mrb[0].mxu0
      %v1225 = vpop.f32.mrb[0].mxu0
      %v1226 = vadd.f32 %v1113, %v1225
      %v1227 = vpop.f32.mrb[0].mxu0
      %1228 = vmatprep.mubr.bf16.mxu0 0
      %1229 = vmatmul.mubr.bf16.gmra.mrb[0].mxu0 %v1138
      %v1230 = vpop.f32.mrb[0].mxu0
      %v1231 = vadd.f32 %v1113, %v1230
      %v1232 = vpop.f32.mrb[0].mxu0
      %v1233 = vpop.f32.mrb[0].mxu0
      %v1234 = vadd.f32 %v1113, %v1233
      %v1235 = vpop.f32.mrb[0].mxu0
      %1236 = vdwg.mxu0
      %v1237 = vmax.f32 %v1175, 0.0
      %v1238 = vmax.f32 %v1178, 0.0
      %v1239 = vmax.f32 %v1183, 0.0
      %v1240 = vmax.f32 %v1186, 0.0
      %v1241 = vmax.f32 %v1191, 0.0
      %v1242 = vmax.f32 %v1194, 0.0
      %v1243 = vmax.f32 %v1199, 0.0
      %v1244 = vmax.f32 %v1202, 0.0
      %v1245 = vmax.f32 %v1207, 0.0
      %v1246 = vmax.f32 %v1210, 0.0
      %v1247 = vmax.f32 %v1215, 0.0
      %v1248 = vmax.f32 %v1218, 0.0
      %v1249 = vmax.f32 %v1223, 0.0
      %v1250 = vmax.f32 %v1226, 0.0
      %v1251 = vmax.f32 %v1231, 0.0
      %v1252 = vmax.f32 %v1234, 0.0
      %v1253 = vpack.c.bf16 %v1238, %v1237
      %v1254 = vpack.c.bf16 %v1240, %v1239
      %v1255 = vpack.c.bf16 %v1242, %v1241
      %v1256 = vpack.c.bf16 %v1244, %v1243
      %v1257 = vpack.c.bf16 %v1246, %v1245
      %v1258 = vpack.c.bf16 %v1248, %v1247
      %v1259 = vpack.c.bf16 %v1250, %v1249
      %v1260 = vpack.c.bf16 %v1252, %v1251
      %v1261 = vld [vmem:[%s5] sm:$0xf]
      %v1262 = vld [vmem:[%s5 + $0x4] sm:$0xf]
      %v1263 = vld [vmem:[%s5 + $0x8] sm:$0xf]
      %v1264 = vld [vmem:[%s5 + $0xc] sm:$0xf]
      %v1266 = vlaneseq
      %v1267 = vshrl.u32 %v1266, 7
      %v1268 = vsub.s32 0, %v1267
      %v1269 = vrot.slane %v311, %v1268
      %v1275 = vunpack.c.l.b16 %v1261
      %v1276 = vunpack.c.l.b16 %v1262
      %v1277 = vunpack.c.l.b16 %v1263
      %v1278 = vunpack.c.l.b16 %v1264
      %v1279 = vpack.c.b16 %v1276, %v1275
      %v1280 = vpack.c.b16 %v1278, %v1277
      %v1284 = vsel %vm602, %v1253, 0
      %v1287 = vsel %vm602, %v1254, 0
      %v1290 = vsel %vm602, %v1255, 0
      %v1293 = vsel %vm602, %v1256, 0
      %v1296 = vsel %vm602, %v1257, 0
      %v1299 = vsel %vm602, %v1258, 0
      %v1302 = vsel %vm602, %v1259, 0
      %v1305 = vsel %vm602, %v1260, 0
      %1307 = vmatprep.subr.bf16.mxu0 0
      %1308 = vmatpush1.bf16.msra.mxu0 %v1279
      %1309 = vmatprep.subr.bf16.mxu0 0
      %1310 = vmatpush1.bf16.msra.mxu0 %v1280
      %1311 = vmatprep.subr.bf16.mxu0 0
      %1312 = vmatpush1.bf16.msra.mxu0 0
      %1313 = vmatprep.subr.bf16.mxu0 0
      %1314 = vmatpush1.bf16.msra.mxu0 0
      %1315 = vmatprep.subr.bf16.mxu0 0
      %1316 = vmatpush1.bf16.msra.mxu0 0
      %1317 = vmatprep.subr.bf16.mxu0 0
      %1318 = vmatpush1.bf16.msra.mxu0 0
      %1319 = vmatprep.subr.bf16.mxu0 0
      %1320 = vmatpush1.bf16.msra.mxu0 0
      %1321 = vmatprep.subr.bf16.mxu0 0
      %1322 = vmatpush1.bf16.msra.mxu0 0
      %1323 = vmatprep.subr.bf16.mxu0 0
      %1324 = vmatpush1.bf16.msra.mxu0 0
      %1325 = vmatprep.subr.bf16.mxu0 0
      %1326 = vmatpush1.bf16.msra.mxu0 0
      %1327 = vmatprep.subr.bf16.mxu0 0
      %1328 = vmatpush1.bf16.msra.mxu0 0
      %1329 = vmatprep.subr.bf16.mxu0 0
      %1330 = vmatpush1.bf16.msra.mxu0 0
      %1331 = vmatprep.subr.bf16.mxu0 0
      %1332 = vmatpush1.bf16.msra.mxu0 0
      %1333 = vmatprep.subr.bf16.mxu0 0
      %1334 = vmatpush1.bf16.msra.mxu0 0
      %1335 = vmatprep.subr.bf16.mxu0 0
      %1336 = vmatpush1.bf16.msra.mxu0 0
      %1337 = vmatprep.subr.bf16.mxu0 0
      %1338 = vmatpush1.bf16.msra.mxu0 0
      %1339 = vmatprep.mubr.bf16.mxu0 0
      %1340 = vmatmul.mubr.bf16.gmra.mrb[0].mxu0 %v1284
      %v1341 = vpop.f32.mrb[0].mxu0
      %v1342 = vadd.f32 %v1269, %v1341
      %v1343 = vpop.f32.mrb[0].mxu0
      %v1344 = vpop.f32.mrb[0].mxu0
      %v1345 = vadd.f32 %v1269, %v1344
      %v1346 = vpop.f32.mrb[0].mxu0
      %1347 = vmatprep.mubr.bf16.mxu0 0
      %1348 = vmatmul.mubr.bf16.gmra.mrb[0].mxu0 %v1287
      %v1349 = vpop.f32.mrb[0].mxu0
      %v1350 = vadd.f32 %v1269, %v1349
      %v1351 = vpop.f32.mrb[0].mxu0
      %v1352 = vpop.f32.mrb[0].mxu0
      %v1353 = vadd.f32 %v1269, %v1352
      %v1354 = vpop.f32.mrb[0].mxu0
      %1355 = vmatprep.mubr.bf16.mxu0 0
      %1356 = vmatmul.mubr.bf16.gmra.mrb[0].mxu0 %v1290
      %v1357 = vpop.f32.mrb[0].mxu0
      %v1358 = vadd.f32 %v1269, %v1357
      %v1359 = vpop.f32.mrb[0].mxu0
      %v1360 = vpop.f32.mrb[0].mxu0
      %v1361 = vadd.f32 %v1269, %v1360
      %v1362 = vpop.f32.mrb[0].mxu0
      %1363 = vmatprep.mubr.bf16.mxu0 0
      %1364 = vmatmul.mubr.bf16.gmra.mrb[0].mxu0 %v1293
      %v1365 = vpop.f32.mrb[0].mxu0
      %v1366 = vadd.f32 %v1269, %v1365
      %v1367 = vpop.f32.mrb[0].mxu0
      %v1368 = vpop.f32.mrb[0].mxu0
      %v1369 = vadd.f32 %v1269, %v1368
      %v1370 = vpop.f32.mrb[0].mxu0
      %1371 = vmatprep.mubr.bf16.mxu0 0
      %1372 = vmatmul.mubr.bf16.gmra.mrb[0].mxu0 %v1296
      %v1373 = vpop.f32.mrb[0].mxu0
      %v1374 = vadd.f32 %v1269, %v1373
      %v1375 = vpop.f32.mrb[0].mxu0
      %v1376 = vpop.f32.mrb[0].mxu0
      %v1377 = vadd.f32 %v1269, %v1376
      %v1378 = vpop.f32.mrb[0].mxu0
      %1379 = vmatprep.mubr.bf16.mxu0 0
      %1380 = vmatmul.mubr.bf16.gmra.mrb[0].mxu0 %v1299
      %v1381 = vpop.f32.mrb[0].mxu0
      %v1382 = vadd.f32 %v1269, %v1381
      %v1383 = vpop.f32.mrb[0].mxu0
      %v1384 = vpop.f32.mrb[0].mxu0
      %v1385 = vadd.f32 %v1269, %v1384
      %v1386 = vpop.f32.mrb[0].mxu0
      %1387 = vmatprep.mubr.bf16.mxu0 0
      %1388 = vmatmul.mubr.bf16.gmra.mrb[0].mxu0 %v1302
      %v1389 = vpop.f32.mrb[0].mxu0
      %v1390 = vadd.f32 %v1269, %v1389
      %v1391 = vpop.f32.mrb[0].mxu0
      %v1392 = vpop.f32.mrb[0].mxu0
      %v1393 = vadd.f32 %v1269, %v1392
      %v1394 = vpop.f32.mrb[0].mxu0
      %1395 = vmatprep.mubr.bf16.mxu0 0
      %1396 = vmatmul.mubr.bf16.gmra.mrb[0].mxu0 %v1305
      %v1397 = vpop.f32.mrb[0].mxu0
      %v1398 = vadd.f32 %v1269, %v1397
      %v1399 = vpop.f32.mrb[0].mxu0
      %v1400 = vpop.f32.mrb[0].mxu0
      %v1401 = vadd.f32 %v1269, %v1400
      %v1402 = vpop.f32.mrb[0].mxu0
      %1403 = vdwg.mxu0
      %v1404 = vmax.f32 %v1342, 0.0
      %v1405 = vmax.f32 %v1345, 0.0
      %v1406 = vmax.f32 %v1350, 0.0
      %v1407 = vmax.f32 %v1353, 0.0
      %v1408 = vmax.f32 %v1358, 0.0
      %v1409 = vmax.f32 %v1361, 0.0
      %v1410 = vmax.f32 %v1366, 0.0
      %v1411 = vmax.f32 %v1369, 0.0
      %v1412 = vmax.f32 %v1374, 0.0
      %v1413 = vmax.f32 %v1377, 0.0
      %v1414 = vmax.f32 %v1382, 0.0
      %v1415 = vmax.f32 %v1385, 0.0
      %v1416 = vmax.f32 %v1390, 0.0
      %v1417 = vmax.f32 %v1393, 0.0
      %v1418 = vmax.f32 %v1398, 0.0
      %v1419 = vmax.f32 %v1401, 0.0
      %v1420 = vpack.c.bf16 %v1405, %v1404
      %v1421 = vpack.c.bf16 %v1407, %v1406
      %v1422 = vpack.c.bf16 %v1409, %v1408
      %v1423 = vpack.c.bf16 %v1411, %v1410
      %v1424 = vpack.c.bf16 %v1413, %v1412
      %v1425 = vpack.c.bf16 %v1415, %v1414
      %v1426 = vpack.c.bf16 %v1417, %v1416
      %v1427 = vpack.c.bf16 %v1419, %v1418
      %v1428 = vld [vmem:[%s6] sm:$0xf]
      %v1429 = vld [vmem:[%s6 + $0x4] sm:$0xf]
      %v1430 = vld [vmem:[%s6 + $0x8] sm:$0xf]
      %v1431 = vld [vmem:[%s6 + $0xc] sm:$0xf]
      %v1436 = vunpack.c.l.b16 %v1428
      %v1437 = vunpack.c.l.b16 %v1429
      %v1438 = vunpack.c.l.b16 %v1430
      %v1439 = vunpack.c.l.b16 %v1431
      %v1440 = vpack.c.b16 %v1437, %v1436
      %v1441 = vpack.c.b16 %v1439, %v1438
      %1444 = vrot.lane.b32.xlu0 %v1269, 96
      %v1445 = vpop.permute.xlu0 %1444
      %v1448 = vsel %vm602, %v1420, 0
      %v1451 = vsel %vm602, %v1421, 0
      %v1454 = vsel %vm602, %v1422, 0
      %v1457 = vsel %vm602, %v1423, 0
      %v1460 = vsel %vm602, %v1424, 0
      %v1463 = vsel %vm602, %v1425, 0
      %v1466 = vsel %vm602, %v1426, 0
      %v1469 = vsel %vm602, %v1427, 0
      %1471 = vmatprep.subr.bf16.mxu0 0
      %1472 = vmatpush1.bf16.msra.mxu0 %v1440
      %1473 = vmatprep.subr.bf16.mxu0 0
      %1474 = vmatpush1.bf16.msra.mxu0 %v1441
      %1475 = vmatprep.subr.bf16.mxu0 0
      %1476 = vmatpush1.bf16.msra.mxu0 0
      %1477 = vmatprep.subr.bf16.mxu0 0
      %1478 = vmatpush1.bf16.msra.mxu0 0
      %1479 = vmatprep.subr.bf16.mxu0 0
      %1480 = vmatpush1.bf16.msra.mxu0 0
      %1481 = vmatprep.subr.bf16.mxu0 0
      %1482 = vmatpush1.bf16.msra.mxu0 0
      %1483 = vmatprep.subr.bf16.mxu0 0
      %1484 = vmatpush1.bf16.msra.mxu0 0
      %1485 = vmatprep.subr.bf16.mxu0 0
      %1486 = vmatpush1.bf16.msra.mxu0 0
      %1487 = vmatprep.subr.bf16.mxu0 0
      %1488 = vmatpush1.bf16.msra.mxu0 0
      %1489 = vmatprep.subr.bf16.mxu0 0
      %1490 = vmatpush1.bf16.msra.mxu0 0
      %1491 = vmatprep.subr.bf16.mxu0 0
      %1492 = vmatpush1.bf16.msra.mxu0 0
      %1493 = vmatprep.subr.bf16.mxu0 0
      %1494 = vmatpush1.bf16.msra.mxu0 0
      %1495 = vmatprep.subr.bf16.mxu0 0
      %1496 = vmatpush1.bf16.msra.mxu0 0
      %1497 = vmatprep.subr.bf16.mxu0 0
      %1498 = vmatpush1.bf16.msra.mxu0 0
      %1499 = vmatprep.subr.bf16.mxu0 0
      %1500 = vmatpush1.bf16.msra.mxu0 0
      %1501 = vmatprep.subr.bf16.mxu0 0
      %1502 = vmatpush1.bf16.msra.mxu0 0
      %1503 = vmatprep.mubr.bf16.mxu0 0
      %1504 = vmatmul.mubr.bf16.gmra.mrb[0].mxu0 %v1448
      %v1505 = vpop.f32.mrb[0].mxu0
      %v1506 = vadd.f32 %v1445, %v1505
      %v1507 = vpop.f32.mrb[0].mxu0
      %v1508 = vpop.f32.mrb[0].mxu0
      %v1509 = vadd.f32 %v1445, %v1508
      %v1510 = vpop.f32.mrb[0].mxu0
      %1511 = vmatprep.mubr.bf16.mxu0 0
      %1512 = vmatmul.mubr.bf16.gmra.mrb[0].mxu0 %v1451
      %v1513 = vpop.f32.mrb[0].mxu0
      %v1514 = vadd.f32 %v1445, %v1513
      %v1515 = vpop.f32.mrb[0].mxu0
      %v1516 = vpop.f32.mrb[0].mxu0
      %v1517 = vadd.f32 %v1445, %v1516
      %v1518 = vpop.f32.mrb[0].mxu0
      %1519 = vmatprep.mubr.bf16.mxu0 0
      %1520 = vmatmul.mubr.bf16.gmra.mrb[0].mxu0 %v1454
      %v1521 = vpop.f32.mrb[0].mxu0
      %v1522 = vadd.f32 %v1445, %v1521
      %v1523 = vpop.f32.mrb[0].mxu0
      %v1524 = vpop.f32.mrb[0].mxu0
      %v1525 = vadd.f32 %v1445, %v1524
      %v1526 = vpop.f32.mrb[0].mxu0
      %1527 = vmatprep.mubr.bf16.mxu0 0
      %1528 = vmatmul.mubr.bf16.gmra.mrb[0].mxu0 %v1457
      %v1529 = vpop.f32.mrb[0].mxu0
      %v1530 = vadd.f32 %v1445, %v1529
      %v1531 = vpop.f32.mrb[0].mxu0
      %v1532 = vpop.f32.mrb[0].mxu0
      %v1533 = vadd.f32 %v1445, %v1532
      %v1534 = vpop.f32.mrb[0].mxu0
      %1535 = vmatprep.mubr.bf16.mxu0 0
      %1536 = vmatmul.mubr.bf16.gmra.mrb[0].mxu0 %v1460
      %v1537 = vpop.f32.mrb[0].mxu0
      %v1538 = vadd.f32 %v1445, %v1537
      %v1539 = vpop.f32.mrb[0].mxu0
      %v1540 = vpop.f32.mrb[0].mxu0
      %v1541 = vadd.f32 %v1445, %v1540
      %v1542 = vpop.f32.mrb[0].mxu0
      %1543 = vmatprep.mubr.bf16.mxu0 0
      %1544 = vmatmul.mubr.bf16.gmra.mrb[0].mxu0 %v1463
      %v1545 = vpop.f32.mrb[0].mxu0
      %v1546 = vadd.f32 %v1445, %v1545
      %v1547 = vpop.f32.mrb[0].mxu0
      %v1548 = vpop.f32.mrb[0].mxu0
      %v1549 = vadd.f32 %v1445, %v1548
      %v1550 = vpop.f32.mrb[0].mxu0
      %1551 = vmatprep.mubr.bf16.mxu0 0
      %1552 = vmatmul.mubr.bf16.gmra.mrb[0].mxu0 %v1466
      %v1553 = vpop.f32.mrb[0].mxu0
      %v1554 = vadd.f32 %v1445, %v1553
      %v1555 = vpop.f32.mrb[0].mxu0
      %v1556 = vpop.f32.mrb[0].mxu0
      %v1557 = vadd.f32 %v1445, %v1556
      %v1558 = vpop.f32.mrb[0].mxu0
      %1559 = vmatprep.mubr.bf16.mxu0 0
      %1560 = vmatmul.mubr.bf16.gmra.mrb[0].mxu0 %v1469
      %v1561 = vpop.f32.mrb[0].mxu0
      %v1562 = vadd.f32 %v1445, %v1561
      %v1563 = vpop.f32.mrb[0].mxu0
      %v1564 = vpop.f32.mrb[0].mxu0
      %v1565 = vadd.f32 %v1445, %v1564
      %v1566 = vpop.f32.mrb[0].mxu0
      %1567 = vdwg.mxu0
      %v1568 = vxor.u32 %v1506, 2147483648
      %v1569 = vxor.u32 %v1509, 2147483648
      %v1570 = vxor.u32 %v1514, 2147483648
      %v1571 = vxor.u32 %v1517, 2147483648
      %v1572 = vxor.u32 %v1522, 2147483648
      %v1573 = vxor.u32 %v1525, 2147483648
      %v1574 = vxor.u32 %v1530, 2147483648
      %v1575 = vxor.u32 %v1533, 2147483648
      %v1576 = vxor.u32 %v1538, 2147483648
      %v1577 = vxor.u32 %v1541, 2147483648
      %v1578 = vxor.u32 %v1546, 2147483648
      %v1579 = vxor.u32 %v1549, 2147483648
      %v1580 = vxor.u32 %v1554, 2147483648
      %v1581 = vxor.u32 %v1557, 2147483648
      %v1582 = vxor.u32 %v1562, 2147483648
      %v1583 = vxor.u32 %v1565, 2147483648
      %v1584 = vmul.f32 %v1568, 1.442695
      %v1585 = vpow.pop %v1584
      %v1586 = vmul.f32 %v1569, 1.442695
      %v1587 = vpow.pop %v1586
      %v1588 = vmul.f32 %v1570, 1.442695
      %v1589 = vpow.pop %v1588
      %v1590 = vmul.f32 %v1571, 1.442695
      %v1591 = vpow.pop %v1590
      %v1592 = vmul.f32 %v1572, 1.442695
      %v1593 = vpow.pop %v1592
      %v1594 = vmul.f32 %v1573, 1.442695
      %v1595 = vpow.pop %v1594
      %v1596 = vmul.f32 %v1574, 1.442695
      %v1597 = vpow.pop %v1596
      %v1598 = vmul.f32 %v1575, 1.442695
      %v1599 = vpow.pop %v1598
      %v1600 = vmul.f32 %v1576, 1.442695
      %v1601 = vpow.pop %v1600
      %v1602 = vmul.f32 %v1577, 1.442695
      %v1603 = vpow.pop %v1602
      %v1604 = vmul.f32 %v1578, 1.442695
      %v1605 = vpow.pop %v1604
      %v1606 = vmul.f32 %v1579, 1.442695
      %v1607 = vpow.pop %v1606
      %v1608 = vmul.f32 %v1580, 1.442695
      %v1609 = vpow.pop %v1608
      %v1610 = vmul.f32 %v1581, 1.442695
      %v1611 = vpow.pop %v1610
      %v1612 = vmul.f32 %v1582, 1.442695
      %v1613 = vpow.pop %v1612
      %v1614 = vmul.f32 %v1583, 1.442695
      %v1615 = vpow.pop %v1614
      %v1616 = vadd.f32 %v1585, 1.0
      %v1617 = vadd.f32 %v1587, 1.0
      %v1618 = vadd.f32 %v1589, 1.0
      %v1619 = vadd.f32 %v1591, 1.0
      %v1620 = vadd.f32 %v1593, 1.0
      %v1621 = vadd.f32 %v1595, 1.0
      %v1622 = vadd.f32 %v1597, 1.0
      %v1623 = vadd.f32 %v1599, 1.0
      %v1624 = vadd.f32 %v1601, 1.0
      %v1625 = vadd.f32 %v1603, 1.0
      %v1626 = vadd.f32 %v1605, 1.0
      %v1627 = vadd.f32 %v1607, 1.0
      %v1628 = vadd.f32 %v1609, 1.0
      %v1629 = vadd.f32 %v1611, 1.0
      %v1630 = vadd.f32 %v1613, 1.0
      %v1631 = vadd.f32 %v1615, 1.0
      %v1632 = vrcp.pop %v1616
      %v1633 = vmul.f32 1.0, %v1632
      %v1634 = vrcp.pop %v1617
      %v1635 = vmul.f32 1.0, %v1634
      %v1636 = vrcp.pop %v1618
      %v1637 = vmul.f32 1.0, %v1636
      %v1638 = vrcp.pop %v1619
      %v1639 = vmul.f32 1.0, %v1638
      %v1640 = vrcp.pop %v1620
      %v1641 = vmul.f32 1.0, %v1640
      %v1642 = vrcp.pop %v1621
      %v1643 = vmul.f32 1.0, %v1642
      %v1644 = vrcp.pop %v1622
      %v1645 = vmul.f32 1.0, %v1644
      %v1646 = vrcp.pop %v1623
      %v1647 = vmul.f32 1.0, %v1646
      %v1648 = vrcp.pop %v1624
      %v1649 = vmul.f32 1.0, %v1648
      %v1650 = vrcp.pop %v1625
      %v1651 = vmul.f32 1.0, %v1650
      %v1652 = vrcp.pop %v1626
      %v1653 = vmul.f32 1.0, %v1652
      %v1654 = vrcp.pop %v1627
      %v1655 = vmul.f32 1.0, %v1654
      %v1656 = vrcp.pop %v1628
      %v1657 = vmul.f32 1.0, %v1656
      %v1658 = vrcp.pop %v1629
      %v1659 = vmul.f32 1.0, %v1658
      %v1660 = vrcp.pop %v1630
      %v1661 = vmul.f32 1.0, %v1660
      %v1662 = vrcp.pop %v1631
      %v1663 = vmul.f32 1.0, %v1662
      %1680 = vrot.lane.b32.xlu0 %v826, 64
      %v1681 = vpop.permute.xlu0 %1680
      %1682 = vrot.lane.b32.xlu0 %v829, 64
      %v1683 = vpop.permute.xlu0 %1682
      %1684 = vrot.lane.b32.xlu0 %v834, 64
      %v1685 = vpop.permute.xlu0 %1684
      %1686 = vrot.lane.b32.xlu0 %v837, 64
      %v1687 = vpop.permute.xlu0 %1686
      %1688 = vrot.lane.b32.xlu0 %v842, 64
      %v1689 = vpop.permute.xlu0 %1688
      %1690 = vrot.lane.b32.xlu0 %v845, 64
      %v1691 = vpop.permute.xlu0 %1690
      %1692 = vrot.lane.b32.xlu0 %v850, 64
      %v1693 = vpop.permute.xlu0 %1692
      %1694 = vrot.lane.b32.xlu0 %v853, 64
      %v1695 = vpop.permute.xlu0 %1694
      %1696 = vrot.lane.b32.xlu0 %v858, 64
      %v1697 = vpop.permute.xlu0 %1696
      %1698 = vrot.lane.b32.xlu0 %v861, 64
      %v1699 = vpop.permute.xlu0 %1698
      %1700 = vrot.lane.b32.xlu0 %v866, 64
      %v1701 = vpop.permute.xlu0 %1700
      %1702 = vrot.lane.b32.xlu0 %v869, 64
      %v1703 = vpop.permute.xlu0 %1702
      %1704 = vrot.lane.b32.xlu0 %v874, 64
      %v1705 = vpop.permute.xlu0 %1704
      %1706 = vrot.lane.b32.xlu0 %v877, 64
      %v1707 = vpop.permute.xlu0 %1706
      %1708 = vrot.lane.b32.xlu0 %v882, 64
      %v1709 = vpop.permute.xlu0 %1708
      %1710 = vrot.lane.b32.xlu0 %v885, 64
      %v1711 = vpop.permute.xlu0 %1710
      %vm1728 = vcmask 523264
      %v1729 = vsel %vm1728, %v1633, %v1681
      %v1730 = vsel %vm1728, %v1635, %v1683
      %v1731 = vsel %vm1728, %v1637, %v1685
      %v1732 = vsel %vm1728, %v1639, %v1687
      %v1733 = vsel %vm1728, %v1641, %v1689
      %v1734 = vsel %vm1728, %v1643, %v1691
      %v1735 = vsel %vm1728, %v1645, %v1693
      %v1736 = vsel %vm1728, %v1647, %v1695
      %v1737 = vsel %vm1728, %v1649, %v1697
      %v1738 = vsel %vm1728, %v1651, %v1699
      %v1739 = vsel %vm1728, %v1653, %v1701
      %v1740 = vsel %vm1728, %v1655, %v1703
      %v1741 = vsel %vm1728, %v1657, %v1705
      %v1742 = vsel %vm1728, %v1659, %v1707
      %v1743 = vsel %vm1728, %v1661, %v1709
      %v1744 = vsel %vm1728, %v1663, %v1711
      %vm1745 = vcmask 785408
      %v1746 = vsel %vm1745, %v1729, 0.0
      %v1747 = vsel %vm1745, %v1730, 0.0
      %v1748 = vsel %vm1745, %v1731, 0.0
      %v1749 = vsel %vm1745, %v1732, 0.0
      %v1750 = vsel %vm1745, %v1733, 0.0
      %v1751 = vsel %vm1745, %v1734, 0.0
      %v1752 = vsel %vm1745, %v1735, 0.0
      %v1753 = vsel %vm1745, %v1736, 0.0
      %v1754 = vsel %vm1745, %v1737, 0.0
      %v1755 = vsel %vm1745, %v1738, 0.0
      %v1756 = vsel %vm1745, %v1739, 0.0
      %v1757 = vsel %vm1745, %v1740, 0.0
      %v1758 = vsel %vm1745, %v1741, 0.0
      %v1759 = vsel %vm1745, %v1742, 0.0
      %v1760 = vsel %vm1745, %v1743, 0.0
      %v1761 = vsel %vm1745, %v1744, 0.0
      %1762 = vst [vmem:[%s307] sm:$0xff] %v1746
      %1763 = vst [vmem:[%s307 + $0x8] sm:$0xff] %v1747
      %1764 = vst [vmem:[%s307 + $0x10] sm:$0xff] %v1748
      %1765 = vst [vmem:[%s307 + $0x18] sm:$0xff] %v1749
      %1766 = vst [vmem:[%s307 + $0x20] sm:$0xff] %v1750
      %1767 = vst [vmem:[%s307 + $0x28] sm:$0xff] %v1751
      %1768 = vst [vmem:[%s307 + $0x30] sm:$0xff] %v1752
      %1769 = vst [vmem:[%s307 + $0x38] sm:$0xff] %v1753
      %1770 = vst [vmem:[%s307 + $0x40] sm:$0xff] %v1754
      %1771 = vst [vmem:[%s307 + $0x48] sm:$0xff] %v1755
      %1772 = vst [vmem:[%s307 + $0x50] sm:$0xff] %v1756
      %1773 = vst [vmem:[%s307 + $0x58] sm:$0xff] %v1757
      %1774 = vst [vmem:[%s307 + $0x60] sm:$0xff] %v1758
      %1775 = vst [vmem:[%s307 + $0x68] sm:$0xff] %v1759
      %1776 = vst [vmem:[%s307 + $0x70] sm:$0xff] %v1760
      %1777 = vst [vmem:[%s307 + $0x78] sm:$0xff] %v1761
      %s1778 = smul.u32 16, %s19
      %p1779 = scmp.lt.s32.totalorder %s1778, 31
      %s1780 = scalar_select %p1779, %s1778, 31
      %s1781 = smul.addr %s1780, 8
      %s1782 = scalar_lea.vmem %s8, %s1781
      // Predicated region
      $region53: #{vae_forward.1} parent=51 // pred_check
        %p1783 = pneg %p210
      $region54: #{vae_forward.1} parent=51 // pred_check_branch
        %1785 = sbr.rel (%p1783) target = $region56
      $region55: #{vae_forward.1} parent=51 // pred_region
        %s1786 = smul.u32 16, %s19
      $region56: #{vae_forward.1} parent=51 // pred_fallthru
        _
    $region52: #{vae_forward.1} parent=5 // pred_fallthru
      _
    %p1787 = scmp.le.s32.totalorder 2, %s14
    // Predicated region
    $region57: #{vae_forward.1} parent=5 // pred_check
      %p1788 = pneg %p1787
    $region58: #{vae_forward.1} parent=5 // pred_check_branch
      %1790 = sbr.rel (%p1788) target = $region60
    $region59: #{vae_forward.1} parent=5 // pred_region
      %s1791 = ssub.s32 %s14, 2
      // Predicated region
      $region61: #{vae_forward.1} parent=59 // pred_check
        %p1792 = pneg %p216
      $region62: #{vae_forward.1} parent=59 // pred_check_branch
        %1794 = sbr.rel (%p1792) target = $region64
      $region63: #{vae_forward.1} parent=59 // pred_region
        %s1795 = smul.u32 16, %s20
        %p1796 = scmp.lt.s32.totalorder %s1795, 31
        %s1797 = scalar_select %p1796, %s1795, 31
        %s1798 = smul.addr %s1797, 8
        %s1799 = scalar_lea.vmem %s8, %s1798
      $region64: #{vae_forward.1} parent=59 // pred_fallthru
        _
    $region60: #{vae_forward.1} parent=5 // pred_fallthru
      _
  $region6: #{vae_forward.1} parent=0 // loop_footer
    %s18 = sadd.s32 1, %s14
  $region7: #{vae_forward.1} parent=0 // loop_footer_branch
    %13 = sbr.rel target = $region3
  $region8: #{vae_forward.1} parent=0 // loop_exit
    _

</llo_original>
